<compile_context>
chip_gen: v7x
topology: tpu7x:2x2x1
jax: 0.10.0
libtpu: 0.0.40
codegen_flags: <defaults>
</compile_context>

<pallas_src>
import jax
import jax.numpy as jnp
from jax.experimental import pallas as pl
from jax.experimental.pallas import tpu as pltpu


def _mini_pointnet_kernel(x_ref, w1_ref, b1_ref, w2_ref, b2_ref,
                          w3g_ref, w3l_ref, b3_ref, w4_ref, b4_ref, out_ref):
    """One grid step = R (batch, H-row) pairs: full MiniPointNet on an (R*W, C) slab."""
    R, W, C = x_ref.shape
    cdt = w1_ref.dtype                       # MXU compute dtype (bf16 or f32)

    x = x_ref[...].reshape(R * W, C).astype(cdt)

    # first_conv: Conv(C->hide, 1x1, no bias) with BN scale folded into w1,
    # then BN bias + ReLU (f32 epilogue).
    f1 = jnp.dot(x, w1_ref[...], preferred_element_type=jnp.float32)
    f1 = jnp.maximum(f1 + b1_ref[...], 0.0).astype(cdt)
    #              Conv(hide -> hide//2, 1x1, with bias)
    f = jnp.dot(f1, w2_ref[...], preferred_element_type=jnp.float32) + b2_ref[...]

    # Global feature: per-(b,h) max over W (sublane-axis XLU reduce).
    half = f.shape[-1]
    g = jnp.max(f.reshape(R, W, half), axis=1)                    # (R, hide//2)

    # second_conv first matmul, split so the concat is never materialized:
    #   [g_bcast, f] @ w3  ==  g @ w3[:hide//2]  +  f @ w3[hide//2:]
    loc = jnp.dot(f.astype(cdt), w3l_ref[...],
                  preferred_element_type=jnp.float32)             # (R*W, hide)
    glo = jnp.dot(g.astype(cdt), w3g_ref[...],
                  preferred_element_type=jnp.float32)             # (R, hide)
    hide = loc.shape[-1]
    f2 = jnp.maximum(loc.reshape(R, W, hide) + glo[:, None, :] + b3_ref[...], 0.0)
    f2 = f2.reshape(R * W, hide).astype(cdt)

    #              Conv(hide -> feature_dim, 1x1, with bias); feat lane-padded to 128.
    o = jnp.dot(f2, w4_ref[...], preferred_element_type=jnp.float32) + b4_ref[...]
    # Final max over W -> lane-dense (R, feat_pad) unmasked store.
    out_ref[...] = jnp.max(o.reshape(R, W, -1), axis=1).astype(out_ref.dtype)


def _prepare_params(params, compute_dtype):
    """Fold BN into weights, split w3 by input halves, lane-pad the last layer."""
    hide = params["w1"].shape[1]
    feat = params["w4"].shape[1]
    feat_p = -(-feat // 128) * 128

    w1f = (params["w1"] * params["s1"]).astype(compute_dtype)      # (C, hide)
    w3f = params["w3"] * params["s3"]                              # (hide, hide)
    w3g = w3f[: hide // 2].astype(compute_dtype)                   # global half
    w3l = w3f[hide // 2:].astype(compute_dtype)                    # local half

    w4p = jnp.zeros((hide, feat_p), jnp.float32).at[:, :feat].set(params["w4"])
    b4p = jnp.zeros((1, feat_p), jnp.float32).at[:, :feat].set(params["b4"])

    return dict(
        w1=w1f, b1=params["b1"].astype(jnp.float32),
        w2=params["w2"].astype(compute_dtype),
        b2=params["b2"].astype(jnp.float32),
        w3g=w3g, w3l=w3l, b3=params["b3"].astype(jnp.float32),
        w4=w4p.astype(compute_dtype), b4=b4p,
        hide=hide, feat=feat, feat_p=feat_p)


def mini_pointnet_pallas(points, params, *, row_block=None,
                         compute_dtype=jnp.bfloat16):
    """points: (B, C, H, W) float32. Returns (B, feature_dim, H).

    row_block: number of (b, h) rows processed per grid step.  If None it is
    auto-picked so each step feeds the MXU ~1024 rows (R*W).  It is always
    rounded up to a multiple of 8 so the output block stays (8,128)-aligned.
    With hide_dim=256 the per-step activations are ~R*W*hide*4 B, so even
    R*W=4096 stays far below the 32 MiB scoped-VMEM default on any chip.
    """
    B, C, H, W = points.shape
    p = _prepare_params(params, compute_dtype)
    hide, feat, feat_p = p["hide"], p["feat"], p["feat_p"]

    # NCHW -> (B*H, W, C): one fused XLA transpose (extra HBM pass on input).
    # TODO(synk): fuse this relayout into the kernel (ingest (B, C, H*W) blocks,
    # contract the first matmul over the leading C axis).
    x = jnp.transpose(points, (0, 2, 3, 1)).reshape(B * H, W, C)

    n_rows = B * H
    if row_block is None:
        row_block = max(8, -(-1024 // max(W, 1)))       # ~1024 MXU rows / step
    R = max(1, min(row_block, n_rows))
    R = -(-R // 8) * 8                                   # sublane-align row block
    n_blocks = -(-n_rows // R)
    pad_rows = n_blocks * R - n_rows
    if pad_rows:
        x = jnp.pad(x, ((0, pad_rows), (0, 0), (0, 0)))

    full = lambda shape: pl.BlockSpec(shape, lambda i: (0,) * len(shape))

    out = pl.pallas_call(
        _mini_pointnet_kernel,
        out_shape=jax.ShapeDtypeStruct((n_blocks * R, feat_p), jnp.float32),
        grid_spec=pltpu.PrefetchScalarGridSpec(
            num_scalar_prefetch=0,
            grid=(n_blocks,),
            in_specs=[
                pl.BlockSpec((R, W, C), lambda i: (i, 0, 0)),   # x row-block
                full((C, hide)),                                # w1 (BN scale folded)
                full((1, hide)),                                # b1 (BN bias)
                full((hide, hide // 2)),                        # w2
                full((1, hide // 2)),                           # b2
                full((hide // 2, hide)),                        # w3 global half
                full((hide // 2, hide)),                        # w3 local half
                full((1, hide)),                                # b3 (BN bias)
                full((hide, feat_p)),                           # w4 (lane-padded)
                full((1, feat_p)),                              # b4 (lane-padded)
            ],
            out_specs=pl.BlockSpec((R, feat_p), lambda i: (i, 0)),
        ),
        compiler_params=pltpu.CompilerParams(
            dimension_semantics=("parallel",)),   # megacore-shard row blocks (v7x)
    )(x, p["w1"], p["b1"], p["w2"], p["b2"],
      p["w3g"], p["w3l"], p["b3"], p["w4"], p["b4"])

    out = out[:n_rows, :feat]                     # drop row / lane padding
    # (B*H, feat) -> (B, feat, H)   (matches torch.max(..., dim=-1).values on NCHW)
    return jnp.transpose(out.reshape(B, H, feat), (0, 2, 1))


def mini_pointnet_ref(points, params):
    """Pure-JAX f32 reference of the same forward pass (for correctness check)."""
    hp = dict(precision="highest")
    x = jnp.transpose(points, (0, 2, 3, 1))  # (B, H, W, C)
    f1 = jnp.maximum(
        jnp.einsum("bhwc,cd->bhwd", x, params["w1"], **hp) * params["s1"]
        + params["b1"], 0.0)
    f = jnp.einsum("bhwd,de->bhwe", f1, params["w2"], **hp) + params["b2"]
    g = jnp.max(f, axis=2, keepdims=True)
    cat = jnp.concatenate([jnp.broadcast_to(g, f.shape), f], axis=-1)
    f2 = jnp.maximum(
        jnp.einsum("bhwc,cd->bhwd", cat, params["w3"], **hp) * params["s3"]
        + params["b3"], 0.0)
    o = jnp.einsum("bhwd,de->bhwe", f2, params["w4"], **hp) + params["b4"]
    return jnp.transpose(jnp.max(o, axis=2), (0, 2, 1))  # (B, feat, H)


def make_params(key, channels, feature_dim, hide_dim):
    """Deterministic synthetic parameters.

    Conv weights are stored as (C_in, C_out) since all convs are 1x1 (a real
    PyTorch checkpoint (C_out, C_in, 1, 1) must be transposed when loaded).
    BatchNorm uses inference semantics: running stats folded to scale/bias.
    """
    ks = jax.random.split(key, 8)
    eps = 1e-5

    def bn_fold(kg, kb, km, kv, c):
        gamma = 1.0 + 0.1 * jax.random.normal(kg, (c,), jnp.float32)
        beta = 0.1 * jax.random.normal(kb, (c,), jnp.float32)
        mean = 0.05 * jax.random.normal(km, (c,), jnp.float32)
        var = 1.0 + 0.1 * jnp.abs(jax.random.normal(kv, (c,), jnp.float32))
        scale = gamma / jnp.sqrt(var + eps)
        bias = beta - mean * scale
        return scale.reshape(1, c), bias.reshape(1, c)

    s1, b1 = bn_fold(*jax.random.split(ks[2], 4), hide_dim)
    s3, b3 = bn_fold(*jax.random.split(ks[3], 4), hide_dim)

    return {
        "w1": 0.2 * jax.random.normal(ks[0], (channels, hide_dim), jnp.float32),
        "s1": s1, "b1": b1,
        "w2": 0.2 * jax.random.normal(ks[1], (hide_dim, hide_dim // 2), jnp.float32),
        "b2": 0.05 * jax.random.normal(ks[4], (1, hide_dim // 2), jnp.float32),
        "w3": 0.2 * jax.random.normal(ks[5], (hide_dim, hide_dim), jnp.float32),
        "s3": s3, "b3": b3,
        "w4": 0.2 * jax.random.normal(ks[6], (hide_dim, feature_dim), jnp.float32),
        "b4": 0.05 * jax.random.normal(ks[7], (1, feature_dim), jnp.float32),
    }


if __name__ == "__main__":
    # Small shapes consistent with the module:
    #   points: (B, channels, H, W) ; hide_dim=32 ; feature_dim=32
    B, C, H, W = 2, 4, 8, 16
    hide_dim, feature_dim = 32, 32

    key = jax.random.PRNGKey(0)
    k_x, k_p = jax.random.split(key)
    points = jax.random.normal(k_x, (B, C, H, W), jnp.float32)
    params = make_params(k_p, C, feature_dim, hide_dim)

    ref = mini_pointnet_ref(points, params)

    # Exact (f32 MXU) path with an explicit (non-aligned) row_block: checks the
    # row-batched / split-w3 / folded-BN structure plus the R-alignment logic.
    out_f32 = jax.block_until_ready(
        mini_pointnet_pallas(points, params, row_block=6,
                             compute_dtype=jnp.float32))
    assert out_f32.shape == (B, feature_dim, H), out_f32.shape
    assert jnp.allclose(out_f32, ref, atol=1e-3, rtol=1e-3), \
        float(jnp.max(jnp.abs(out_f32 - ref)))

    # Default bf16 MXU path with auto row_block (single grid step here),
    # f32 accumulation, looser tolerance.
    out_bf16 = jax.block_until_ready(mini_pointnet_pallas(points, params))
    assert out_bf16.shape == (B, feature_dim, H), out_bf16.shape
    assert jnp.allclose(out_bf16, ref, atol=5e-2, rtol=5e-2), \
        float(jnp.max(jnp.abs(out_bf16 - ref)))

    print("KERNEL_OK")
</pallas_src>

<mosaic_0001>
module attributes {stable_mosaic.version = 11 : i64} {
  func.func @_mini_pointnet_kernel(%arg0: i32, %arg1: memref<8x16x4xf32, #tpu.memory_space<vmem>>, %arg2: memref<4x32xf32, #tpu.memory_space<vmem>>, %arg3: memref<1x32xf32, #tpu.memory_space<vmem>>, %arg4: memref<32x16xf32, #tpu.memory_space<vmem>>, %arg5: memref<1x16xf32, #tpu.memory_space<vmem>>, %arg6: memref<16x32xf32, #tpu.memory_space<vmem>>, %arg7: memref<16x32xf32, #tpu.memory_space<vmem>>, %arg8: memref<1x32xf32, #tpu.memory_space<vmem>>, %arg9: memref<32x128xf32, #tpu.memory_space<vmem>>, %arg10: memref<1x128xf32, #tpu.memory_space<vmem>>, %arg11: memref<8x128xf32, #tpu.memory_space<vmem>>) attributes {dimension_semantics = [#tpu.dimension_semantics<parallel>], iteration_bounds = array<i64: 2>, scalar_prefetch = 0 : i64, scratch_operands = 0 : i64, tpu.core_type = #tpu.core_type<tc>, window_params = [{transform_indices = @transform_0, window_bounds = array<i64: 8, 16, 4>}, {pipeline_mode = #tpu.pipeline_mode<synchronous>, transform_indices = @transform_1, window_bounds = array<i64: 4, 32>}, {pipeline_mode = #tpu.pipeline_mode<synchronous>, transform_indices = @transform_2, window_bounds = array<i64: 1, 32>}, {pipeline_mode = #tpu.pipeline_mode<synchronous>, transform_indices = @transform_3, window_bounds = array<i64: 32, 16>}, {pipeline_mode = #tpu.pipeline_mode<synchronous>, transform_indices = @transform_4, window_bounds = array<i64: 1, 16>}, {pipeline_mode = #tpu.pipeline_mode<synchronous>, transform_indices = @transform_5, window_bounds = array<i64: 16, 32>}, {pipeline_mode = #tpu.pipeline_mode<synchronous>, transform_indices = @transform_6, window_bounds = array<i64: 16, 32>}, {pipeline_mode = #tpu.pipeline_mode<synchronous>, transform_indices = @transform_7, window_bounds = array<i64: 1, 32>}, {pipeline_mode = #tpu.pipeline_mode<synchronous>, transform_indices = @transform_8, window_bounds = array<i64: 32, 128>}, {pipeline_mode = #tpu.pipeline_mode<synchronous>, transform_indices = @transform_9, window_bounds = array<i64: 1, 128>}, {transform_indices = @transform_10, window_bounds = array<i64: 8, 128>}]} {
    %c0 = arith.constant 0 : index
    %c0_0 = arith.constant 0 : index
    %c0_1 = arith.constant 0 : index
    %0 = vector.load %arg1[%c0, %c0_0, %c0_1] : memref<8x16x4xf32, #tpu.memory_space<vmem>>, vector<8x16x4xf32>
    %1 = vector.shape_cast %0 : vector<8x16x4xf32> to vector<128x4xf32>
    %c0_2 = arith.constant 0 : index
    %c0_3 = arith.constant 0 : index
    %2 = vector.load %arg2[%c0_2, %c0_3] : memref<4x32xf32, #tpu.memory_space<vmem>>, vector<4x32xf32>
    %cst = arith.constant dense<0.000000e+00> : vector<128x32xf32>
    %3 = tpu.matmul %1, %2, %cst {dimension_numbers = #tpu.dot_dimension_numbers<[1], [0], [0], [1], [0, 0, 1, 1], [], []>} : vector<128x4xf32>, vector<4x32xf32>, vector<128x32xf32> -> vector<128x32xf32>
    %c0_4 = arith.constant 0 : index
    %c0_5 = arith.constant 0 : index
    %4 = vector.load %arg3[%c0_4, %c0_5] : memref<1x32xf32, #tpu.memory_space<vmem>>, vector<1x32xf32>
    %5 = vector.broadcast %4 : vector<1x32xf32> to vector<128x32xf32>
    %6 = arith.addf %3, %5 : vector<128x32xf32>
    %cst_6 = arith.constant 0.000000e+00 : f32
    %7 = vector.broadcast %cst_6 : f32 to vector<128x32xf32>
    %8 = arith.maximumf %6, %7 : vector<128x32xf32>
    %c0_7 = arith.constant 0 : index
    %c0_8 = arith.constant 0 : index
    %9 = vector.load %arg4[%c0_7, %c0_8] : memref<32x16xf32, #tpu.memory_space<vmem>>, vector<32x16xf32>
    %cst_9 = arith.constant dense<0.000000e+00> : vector<128x16xf32>
    %10 = tpu.matmul %8, %9, %cst_9 {dimension_numbers = #tpu.dot_dimension_numbers<[1], [0], [0], [1], [0, 0, 1, 1], [], []>} : vector<128x32xf32>, vector<32x16xf32>, vector<128x16xf32> -> vector<128x16xf32>
    %c0_10 = arith.constant 0 : index
    %c0_11 = arith.constant 0 : index
    %11 = vector.load %arg5[%c0_10, %c0_11] : memref<1x16xf32, #tpu.memory_space<vmem>>, vector<1x16xf32>
    %12 = vector.broadcast %11 : vector<1x16xf32> to vector<128x16xf32>
    %13 = arith.addf %10, %12 : vector<128x16xf32>
    %14 = vector.shape_cast %13 : vector<128x16xf32> to vector<8x16x16xf32>
    %cst_12 = arith.constant dense<0xFF800000> : vector<8x16xf32>
    %15 = vector.multi_reduction <maximumf>, %14, %cst_12 [1] : vector<8x16x16xf32> to vector<8x16xf32>
    %c0_13 = arith.constant 0 : index
    %c0_14 = arith.constant 0 : index
    %16 = vector.load %arg7[%c0_13, %c0_14] : memref<16x32xf32, #tpu.memory_space<vmem>>, vector<16x32xf32>
    %cst_15 = arith.constant dense<0.000000e+00> : vector<128x32xf32>
    %17 = tpu.matmul %13, %16, %cst_15 {dimension_numbers = #tpu.dot_dimension_numbers<[1], [0], [0], [1], [0, 0, 1, 1], [], []>} : vector<128x16xf32>, vector<16x32xf32>, vector<128x32xf32> -> vector<128x32xf32>
    %c0_16 = arith.constant 0 : index
    %c0_17 = arith.constant 0 : index
    %18 = vector.load %arg6[%c0_16, %c0_17] : memref<16x32xf32, #tpu.memory_space<vmem>>, vector<16x32xf32>
    %cst_18 = arith.constant dense<0.000000e+00> : vector<8x32xf32>
    %19 = tpu.matmul %15, %18, %cst_18 {dimension_numbers = #tpu.dot_dimension_numbers<[1], [0], [0], [1], [0, 0, 1, 1], [], []>} : vector<8x16xf32>, vector<16x32xf32>, vector<8x32xf32> -> vector<8x32xf32>
    %20 = vector.shape_cast %17 : vector<128x32xf32> to vector<8x16x32xf32>
    %21 = vector.shape_cast %19 : vector<8x32xf32> to vector<8x1x32xf32>
    %22 = vector.broadcast %21 : vector<8x1x32xf32> to vector<8x16x32xf32>
    %23 = arith.addf %20, %22 : vector<8x16x32xf32>
    %c0_19 = arith.constant 0 : index
    %c0_20 = arith.constant 0 : index
    %24 = vector.load %arg8[%c0_19, %c0_20] : memref<1x32xf32, #tpu.memory_space<vmem>>, vector<1x32xf32>
    %25 = vector.shape_cast %24 : vector<1x32xf32> to vector<1x1x32xf32>
    %26 = vector.broadcast %25 : vector<1x1x32xf32> to vector<8x16x32xf32>
    %27 = arith.addf %23, %26 : vector<8x16x32xf32>
    %cst_21 = arith.constant 0.000000e+00 : f32
    %28 = vector.broadcast %cst_21 : f32 to vector<8x16x32xf32>
    %29 = arith.maximumf %27, %28 : vector<8x16x32xf32>
    %30 = vector.shape_cast %29 : vector<8x16x32xf32> to vector<128x32xf32>
    %c0_22 = arith.constant 0 : index
    %c0_23 = arith.constant 0 : index
    %31 = vector.load %arg9[%c0_22, %c0_23] : memref<32x128xf32, #tpu.memory_space<vmem>>, vector<32x128xf32>
    %cst_24 = arith.constant dense<0.000000e+00> : vector<128x128xf32>
    %32 = tpu.matmul %30, %31, %cst_24 {dimension_numbers = #tpu.dot_dimension_numbers<[1], [0], [0], [1], [0, 0, 1, 1], [], []>} : vector<128x32xf32>, vector<32x128xf32>, vector<128x128xf32> -> vector<128x128xf32>
    %c0_25 = arith.constant 0 : index
    %c0_26 = arith.constant 0 : index
    %33 = vector.load %arg10[%c0_25, %c0_26] : memref<1x128xf32, #tpu.memory_space<vmem>>, vector<1x128xf32>
    %34 = vector.broadcast %33 : vector<1x128xf32> to vector<128x128xf32>
    %35 = arith.addf %32, %34 : vector<128x128xf32>
    %36 = vector.shape_cast %35 : vector<128x128xf32> to vector<8x16x128xf32>
    %cst_27 = arith.constant dense<0xFF800000> : vector<8x128xf32>
    %37 = vector.multi_reduction <maximumf>, %36, %cst_27 [1] : vector<8x16x128xf32> to vector<8x128xf32>
    %c0_28 = arith.constant 0 : index
    %c0_29 = arith.constant 0 : index
    %38 = vector.load %arg11[%c0_28, %c0_29] : memref<8x128xf32, #tpu.memory_space<vmem>>, vector<8x128xf32>
    tpu.vector_store %arg11[%c0_28, %c0_29], %37 {strides = array<i32>} : memref<8x128xf32, #tpu.memory_space<vmem>>, vector<8x128xf32>,
    return
  }
  func.func @transform_0(%arg0: i32) -> (i32, i32, i32) {
    %c0_i32 = arith.constant 0 : i32
    %c0_i32_0 = arith.constant 0 : i32
    %c0_i32_1 = arith.constant 0 : i32
    return %arg0, %c0_i32, %c0_i32_0 : i32, i32, i32
  }
  func.func @transform_1(%arg0: i32) -> (i32, i32) {
    %c0_i32 = arith.constant 0 : i32
    %c0_i32_0 = arith.constant 0 : i32
    %c0_i32_1 = arith.constant 0 : i32
    return %c0_i32, %c0_i32_0 : i32, i32
  }
  func.func @transform_2(%arg0: i32) -> (i32, i32) {
    %c0_i32 = arith.constant 0 : i32
    %c0_i32_0 = arith.constant 0 : i32
    %c0_i32_1 = arith.constant 0 : i32
    return %c0_i32, %c0_i32_0 : i32, i32
  }
  func.func @transform_3(%arg0: i32) -> (i32, i32) {
    %c0_i32 = arith.constant 0 : i32
    %c0_i32_0 = arith.constant 0 : i32
    %c0_i32_1 = arith.constant 0 : i32
    return %c0_i32, %c0_i32_0 : i32, i32
  }
  func.func @transform_4(%arg0: i32) -> (i32, i32) {
    %c0_i32 = arith.constant 0 : i32
    %c0_i32_0 = arith.constant 0 : i32
    %c0_i32_1 = arith.constant 0 : i32
    return %c0_i32, %c0_i32_0 : i32, i32
  }
  func.func @transform_5(%arg0: i32) -> (i32, i32) {
    %c0_i32 = arith.constant 0 : i32
    %c0_i32_0 = arith.constant 0 : i32
    %c0_i32_1 = arith.constant 0 : i32
    return %c0_i32, %c0_i32_0 : i32, i32
  }
  func.func @transform_6(%arg0: i32) -> (i32, i32) {
    %c0_i32 = arith.constant 0 : i32
    %c0_i32_0 = arith.constant 0 : i32
    %c0_i32_1 = arith.constant 0 : i32
    return %c0_i32, %c0_i32_0 : i32, i32
  }
  func.func @transform_7(%arg0: i32) -> (i32, i32) {
    %c0_i32 = arith.constant 0 : i32
    %c0_i32_0 = arith.constant 0 : i32
    %c0_i32_1 = arith.constant 0 : i32
    return %c0_i32, %c0_i32_0 : i32, i32
  }
  func.func @transform_8(%arg0: i32) -> (i32, i32) {
    %c0_i32 = arith.constant 0 : i32
    %c0_i32_0 = arith.constant 0 : i32
    %c0_i32_1 = arith.constant 0 : i32
    return %c0_i32, %c0_i32_0 : i32, i32
  }
  func.func @transform_9(%arg0: i32) -> (i32, i32) {
    %c0_i32 = arith.constant 0 : i32
    %c0_i32_0 = arith.constant 0 : i32
    %c0_i32_1 = arith.constant 0 : i32
    return %c0_i32, %c0_i32_0 : i32, i32
  }
  func.func @transform_10(%arg0: i32) -> (i32, i32) {
    %c0_i32 = arith.constant 0 : i32
    %c0_i32_0 = arith.constant 0 : i32
    return %arg0, %c0_i32 : i32, i32
  }
}

</mosaic_0001>

<llo_original>
// kernel: tpu_custom_call.1
$region0: #{tpu_custom_call.1}
  #allocation0 [shape = 'u32[]', space=smem, size = 0x4, offset = 0x4, fixed_abs, tag = 'smem constant byte address 0x4 - core index']
  #allocation1 [shape = 'u32[144,128]{1,0:T(1,128)}', space=vmem, size = 0x12000, scoped, tag = 'internal scratch']
  %s0 = inlined_call_operand.vmem [shape: f32[16,16,4], index: 0, kind: input, shape index: {}]
  %s1 = inlined_call_operand.vmem [shape: f32[4,32], index: 1, kind: input, shape index: {}]
  %s2 = inlined_call_operand.vmem [shape: f32[1,32], index: 2, kind: input, shape index: {}]
  %s3 = inlined_call_operand.vmem [shape: f32[32,16], index: 3, kind: input, shape index: {}]
  %s4 = inlined_call_operand.vmem [shape: f32[1,16], index: 4, kind: input, shape index: {}]
  %s5 = inlined_call_operand.vmem [shape: f32[16,32], index: 5, kind: input, shape index: {}]
  %s6 = inlined_call_operand.vmem [shape: f32[16,32], index: 6, kind: input, shape index: {}]
  %s7 = inlined_call_operand.vmem [shape: f32[1,32], index: 7, kind: input, shape index: {}]
  %s8 = inlined_call_operand.vmem [shape: f32[32,128], index: 8, kind: input, shape index: {}]
  %s9 = inlined_call_operand.vmem [shape: f32[1,128], index: 9, kind: input, shape index: {}]
  %s10 = inlined_call_operand.hbm [shape: f32[16,128], index: 10, kind: output, shape index: {}]
  %s11 = sld [smem:[#allocation0]]
  $region73: #{tpu_custom_call.1} parent=0
    _
  %s13 = ssub.s32 1, %s11
  %s14 = scalar_select 0, %s13, %s11
  $region1: #{tpu_custom_call.1} parent=0
    #allocation2 [shape = 'u8[8192]{0}', space=vmem, size = 0x2000, scoped, tag = 'output window, operand 0']
    #allocation3 [shape = 's32[2]{0}', space=sflag, size = 0x8, scoped, tag = 'scoped memory for tpu_custom_call.1']
    %15 = vsyncpa [#allocation3], 0
    %s16 = scalar_lea.sflag [#allocation3], 1
    %17 = vsyncpa %s16, 0
    loop: start=0, step=1, limit=4
    $region2: #{tpu_custom_call.1} parent=1 // loop_pre_header
      _
    $region3: #{tpu_custom_call.1} parent=1 // loop_header
      %s19 = sphi 0, %s23
      %p20 = scmp.ge.s32.totalorder %s19, 4
      %s29 = sphi 0, %s31
      %s32 = sphi 0, %s29
      %s33 = sphi 0, %s32
      %s49 = sphi 0, %s33
      %s53 = sphi 0, %s53
      %s55 = sphi 0, %s53
      %s56 = sphi 0, %s55
      %s70 = sphi 0, %s56
      %s74 = sphi 0, %s74
      %s76 = sphi 0, %s74
      %s77 = sphi 0, %s76
      %s91 = sphi 0, %s77
      %s95 = sphi 0, %s95
      %s97 = sphi 0, %s95
      %s98 = sphi 0, %s97
      %s112 = sphi 0, %s98
      %s116 = sphi 0, %s116
      %s118 = sphi 0, %s116
      %s119 = sphi 0, %s118
      %s133 = sphi 0, %s119
      %s137 = sphi 0, %s137
      %s139 = sphi 0, %s137
      %s140 = sphi 0, %s139
      %s154 = sphi 0, %s140
      %s158 = sphi 0, %s158
      %s160 = sphi 0, %s158
      %s161 = sphi 0, %s160
      %s175 = sphi 0, %s161
      %s179 = sphi 0, %s179
      %s181 = sphi 0, %s179
      %s182 = sphi 0, %s181
      %s196 = sphi 0, %s182
      %s200 = sphi 0, %s200
      %s202 = sphi 0, %s200
      %s203 = sphi 0, %s202
      %s217 = sphi 0, %s203
      %s221 = sphi 0, %s221
      %s223 = sphi 0, %s221
      %s224 = sphi 0, %s223
      %s238 = sphi 0, %s224
      %s244 = sphi 0, %s246
      %s247 = sphi 0, %s244
      %s248 = sphi 0, %s247
      %s264 = sphi 0, %s248
    $region4: #{tpu_custom_call.1} parent=1 // loop_header_branch
      %22 = sbr.rel (%p20) target = $region8
    $region5: #{tpu_custom_call.1} parent=1 // loop_body
      %s24 = ssub.s32 %s19, 1
      %s25 = ssub.s32 %s19, 2
      %s26 = sadd.s32 %s19, 1
      %s27 = ssub.s32 %s19, %s26
      %p28 = scmp.eq.s32.totalorder %s27, 0
      %s30 = sadd.s32 %s29, 1
      %s31 = scalar_select %p28, %s29, %s30
      %p34 = pneg %p28
      %p35 = scmp.eq.s32.totalorder %s19, 1
      %p36 = por %p34, %p35
      %p37 = scmp.ne.s32.totalorder %s29, %s32
      %p38 = scmp.eq.s32.totalorder %s19, 0
      %p39 = por %p37, %p38
      %p40 = scmp.ne.s32.totalorder %s29, %s32
      %p41 = scmp.eq.s32.totalorder %s24, 1
      %p42 = por %p40, %p41
      %p43 = scmp.ne.s32.totalorder %s32, %s33
      %p44 = scmp.eq.s32.totalorder %s24, 0
      %p45 = por %p43, %p44
      %p46 = scmp.ne.s32.totalorder %s32, %s33
      %p47 = scmp.eq.s32.totalorder %s25, 1
      %p48 = por %p46, %p47
      %p50 = scmp.ne.s32.totalorder %s33, %s49
      %p51 = scmp.eq.s32.totalorder %s25, 0
      %p52 = por %p50, %p51
      %s54 = sadd.s32 %s53, 1
      %p57 = scmp.eq.s32.totalorder %s19, 1
      %p58 = scmp.ne.s32.totalorder %s53, %s55
      %p59 = scmp.eq.s32.totalorder %s19, 0
      %p60 = por %p58, %p59
      %p61 = scmp.ne.s32.totalorder %s53, %s55
      %p62 = scmp.eq.s32.totalorder %s24, 1
      %p63 = por %p61, %p62
      %p64 = scmp.ne.s32.totalorder %s55, %s56
      %p65 = scmp.eq.s32.totalorder %s24, 0
      %p66 = por %p64, %p65
      %p67 = scmp.ne.s32.totalorder %s55, %s56
      %p68 = scmp.eq.s32.totalorder %s25, 1
      %p69 = por %p67, %p68
      %p71 = scmp.ne.s32.totalorder %s56, %s70
      %p72 = scmp.eq.s32.totalorder %s25, 0
      %p73 = por %p71, %p72
      %s75 = sadd.s32 %s74, 1
      %p78 = scmp.eq.s32.totalorder %s19, 1
      %p79 = scmp.ne.s32.totalorder %s74, %s76
      %p80 = scmp.eq.s32.totalorder %s19, 0
      %p81 = por %p79, %p80
      %p82 = scmp.ne.s32.totalorder %s74, %s76
      %p83 = scmp.eq.s32.totalorder %s24, 1
      %p84 = por %p82, %p83
      %p85 = scmp.ne.s32.totalorder %s76, %s77
      %p86 = scmp.eq.s32.totalorder %s24, 0
      %p87 = por %p85, %p86
      %p88 = scmp.ne.s32.totalorder %s76, %s77
      %p89 = scmp.eq.s32.totalorder %s25, 1
      %p90 = por %p88, %p89
      %p92 = scmp.ne.s32.totalorder %s77, %s91
      %p93 = scmp.eq.s32.totalorder %s25, 0
      %p94 = por %p92, %p93
      %s96 = sadd.s32 %s95, 1
      %p99 = scmp.eq.s32.totalorder %s19, 1
      %p100 = scmp.ne.s32.totalorder %s95, %s97
      %p101 = scmp.eq.s32.totalorder %s19, 0
      %p102 = por %p100, %p101
      %p103 = scmp.ne.s32.totalorder %s95, %s97
      %p104 = scmp.eq.s32.totalorder %s24, 1
      %p105 = por %p103, %p104
      %p106 = scmp.ne.s32.totalorder %s97, %s98
      %p107 = scmp.eq.s32.totalorder %s24, 0
      %p108 = por %p106, %p107
      %p109 = scmp.ne.s32.totalorder %s97, %s98
      %p110 = scmp.eq.s32.totalorder %s25, 1
      %p111 = por %p109, %p110
      %p113 = scmp.ne.s32.totalorder %s98, %s112
      %p114 = scmp.eq.s32.totalorder %s25, 0
      %p115 = por %p113, %p114
      %s117 = sadd.s32 %s116, 1
      %p120 = scmp.eq.s32.totalorder %s19, 1
      %p121 = scmp.ne.s32.totalorder %s116, %s118
      %p122 = scmp.eq.s32.totalorder %s19, 0
      %p123 = por %p121, %p122
      %p124 = scmp.ne.s32.totalorder %s116, %s118
      %p125 = scmp.eq.s32.totalorder %s24, 1
      %p126 = por %p124, %p125
      %p127 = scmp.ne.s32.totalorder %s118, %s119
      %p128 = scmp.eq.s32.totalorder %s24, 0
      %p129 = por %p127, %p128
      %p130 = scmp.ne.s32.totalorder %s118, %s119
      %p131 = scmp.eq.s32.totalorder %s25, 1
      %p132 = por %p130, %p131
      %p134 = scmp.ne.s32.totalorder %s119, %s133
      %p135 = scmp.eq.s32.totalorder %s25, 0
      %p136 = por %p134, %p135
      %s138 = sadd.s32 %s137, 1
      %p141 = scmp.eq.s32.totalorder %s19, 1
      %p142 = scmp.ne.s32.totalorder %s137, %s139
      %p143 = scmp.eq.s32.totalorder %s19, 0
      %p144 = por %p142, %p143
      %p145 = scmp.ne.s32.totalorder %s137, %s139
      %p146 = scmp.eq.s32.totalorder %s24, 1
      %p147 = por %p145, %p146
      %p148 = scmp.ne.s32.totalorder %s139, %s140
      %p149 = scmp.eq.s32.totalorder %s24, 0
      %p150 = por %p148, %p149
      %p151 = scmp.ne.s32.totalorder %s139, %s140
      %p152 = scmp.eq.s32.totalorder %s25, 1
      %p153 = por %p151, %p152
      %p155 = scmp.ne.s32.totalorder %s140, %s154
      %p156 = scmp.eq.s32.totalorder %s25, 0
      %p157 = por %p155, %p156
      %s159 = sadd.s32 %s158, 1
      %p162 = scmp.eq.s32.totalorder %s19, 1
      %p163 = scmp.ne.s32.totalorder %s158, %s160
      %p164 = scmp.eq.s32.totalorder %s19, 0
      %p165 = por %p163, %p164
      %p166 = scmp.ne.s32.totalorder %s158, %s160
      %p167 = scmp.eq.s32.totalorder %s24, 1
      %p168 = por %p166, %p167
      %p169 = scmp.ne.s32.totalorder %s160, %s161
      %p170 = scmp.eq.s32.totalorder %s24, 0
      %p171 = por %p169, %p170
      %p172 = scmp.ne.s32.totalorder %s160, %s161
      %p173 = scmp.eq.s32.totalorder %s25, 1
      %p174 = por %p172, %p173
      %p176 = scmp.ne.s32.totalorder %s161, %s175
      %p177 = scmp.eq.s32.totalorder %s25, 0
      %p178 = por %p176, %p177
      %s180 = sadd.s32 %s179, 1
      %p183 = scmp.eq.s32.totalorder %s19, 1
      %p184 = scmp.ne.s32.totalorder %s179, %s181
      %p185 = scmp.eq.s32.totalorder %s19, 0
      %p186 = por %p184, %p185
      %p187 = scmp.ne.s32.totalorder %s179, %s181
      %p188 = scmp.eq.s32.totalorder %s24, 1
      %p189 = por %p187, %p188
      %p190 = scmp.ne.s32.totalorder %s181, %s182
      %p191 = scmp.eq.s32.totalorder %s24, 0
      %p192 = por %p190, %p191
      %p193 = scmp.ne.s32.totalorder %s181, %s182
      %p194 = scmp.eq.s32.totalorder %s25, 1
      %p195 = por %p193, %p194
      %p197 = scmp.ne.s32.totalorder %s182, %s196
      %p198 = scmp.eq.s32.totalorder %s25, 0
      %p199 = por %p197, %p198
      %s201 = sadd.s32 %s200, 1
      %p204 = scmp.eq.s32.totalorder %s19, 1
      %p205 = scmp.ne.s32.totalorder %s200, %s202
      %p206 = scmp.eq.s32.totalorder %s19, 0
      %p207 = por %p205, %p206
      %p208 = scmp.ne.s32.totalorder %s200, %s202
      %p209 = scmp.eq.s32.totalorder %s24, 1
      %p210 = por %p208, %p209
      %p211 = scmp.ne.s32.totalorder %s202, %s203
      %p212 = scmp.eq.s32.totalorder %s24, 0
      %p213 = por %p211, %p212
      %p214 = scmp.ne.s32.totalorder %s202, %s203
      %p215 = scmp.eq.s32.totalorder %s25, 1
      %p216 = por %p214, %p215
      %p218 = scmp.ne.s32.totalorder %s203, %s217
      %p219 = scmp.eq.s32.totalorder %s25, 0
      %p220 = por %p218, %p219
      %s222 = sadd.s32 %s221, 1
      %p225 = scmp.eq.s32.totalorder %s19, 1
      %p226 = scmp.ne.s32.totalorder %s221, %s223
      %p227 = scmp.eq.s32.totalorder %s19, 0
      %p228 = por %p226, %p227
      %p229 = scmp.ne.s32.totalorder %s221, %s223
      %p230 = scmp.eq.s32.totalorder %s24, 1
      %p231 = por %p229, %p230
      %p232 = scmp.ne.s32.totalorder %s223, %s224
      %p233 = scmp.eq.s32.totalorder %s24, 0
      %p234 = por %p232, %p233
      %p235 = scmp.ne.s32.totalorder %s223, %s224
      %p236 = scmp.eq.s32.totalorder %s25, 1
      %p237 = por %p235, %p236
      %p239 = scmp.ne.s32.totalorder %s224, %s238
      %p240 = scmp.eq.s32.totalorder %s25, 0
      %p241 = por %p239, %p240
      %s242 = ssub.s32 %s19, %s26
      %p243 = scmp.eq.s32.totalorder %s242, 0
      %s245 = sadd.s32 %s244, 1
      %s246 = scalar_select %p243, %s244, %s245
      %p249 = pneg %p243
      %p250 = scmp.eq.s32.totalorder %s19, 1
      %p251 = por %p249, %p250
      %p252 = scmp.ne.s32.totalorder %s244, %s247
      %p253 = scmp.eq.s32.totalorder %s19, 0
      %p254 = por %p252, %p253
      %p255 = scmp.ne.s32.totalorder %s244, %s247
      %p256 = scmp.eq.s32.totalorder %s24, 1
      %p257 = por %p255, %p256
      %p258 = scmp.ne.s32.totalorder %s247, %s248
      %p259 = scmp.eq.s32.totalorder %s24, 0
      %p260 = por %p258, %p259
      %p261 = scmp.ne.s32.totalorder %s247, %s248
      %p262 = scmp.eq.s32.totalorder %s25, 1
      %p263 = por %p261, %p262
      %p265 = scmp.ne.s32.totalorder %s248, %s264
      %p266 = scmp.eq.s32.totalorder %s25, 0
      %p267 = por %p265, %p266
      %p268 = scmp.le.s32.totalorder 1, %s19
      %p269 = scmp.lt.s32.totalorder %s19, 3
      %p270 = pnand %p268, %p269
      %p271 = pneg %p270
      // Predicated region
      $region9: #{tpu_custom_call.1} parent=5 // pred_check
        _
      $region10: #{tpu_custom_call.1} parent=5 // pred_check_branch
        %273 = sbr.rel (%p270) target = $region12
      $region11: #{tpu_custom_call.1} parent=5 // pred_region
        %s274 = ssub.s32 %s19, 1
        // Predicated region
        $region13: #{tpu_custom_call.1} parent=11 // pred_check
          %p275 = pneg %p66
        $region14: #{tpu_custom_call.1} parent=11 // pred_check_branch
          %277 = sbr.rel (%p275) target = $region16
        $region15: #{tpu_custom_call.1} parent=11 // pred_region
          _
        $region16: #{tpu_custom_call.1} parent=11 // pred_fallthru
          _
        // Predicated region
        $region17: #{tpu_custom_call.1} parent=11 // pred_check
          %p278 = pneg %p87
        $region18: #{tpu_custom_call.1} parent=11 // pred_check_branch
          %280 = sbr.rel (%p278) target = $region20
        $region19: #{tpu_custom_call.1} parent=11 // pred_region
          _
        $region20: #{tpu_custom_call.1} parent=11 // pred_fallthru
          _
        // Predicated region
        $region21: #{tpu_custom_call.1} parent=11 // pred_check
          %p281 = pneg %p108
        $region22: #{tpu_custom_call.1} parent=11 // pred_check_branch
          %283 = sbr.rel (%p281) target = $region24
        $region23: #{tpu_custom_call.1} parent=11 // pred_region
          _
        $region24: #{tpu_custom_call.1} parent=11 // pred_fallthru
          _
        // Predicated region
        $region25: #{tpu_custom_call.1} parent=11 // pred_check
          %p284 = pneg %p129
        $region26: #{tpu_custom_call.1} parent=11 // pred_check_branch
          %286 = sbr.rel (%p284) target = $region28
        $region27: #{tpu_custom_call.1} parent=11 // pred_region
          _
        $region28: #{tpu_custom_call.1} parent=11 // pred_fallthru
          _
        // Predicated region
        $region29: #{tpu_custom_call.1} parent=11 // pred_check
          %p287 = pneg %p150
        $region30: #{tpu_custom_call.1} parent=11 // pred_check_branch
          %289 = sbr.rel (%p287) target = $region32
        $region31: #{tpu_custom_call.1} parent=11 // pred_region
          _
        $region32: #{tpu_custom_call.1} parent=11 // pred_fallthru
          _
        // Predicated region
        $region33: #{tpu_custom_call.1} parent=11 // pred_check
          %p290 = pneg %p171
        $region34: #{tpu_custom_call.1} parent=11 // pred_check_branch
          %292 = sbr.rel (%p290) target = $region36
        $region35: #{tpu_custom_call.1} parent=11 // pred_region
          _
        $region36: #{tpu_custom_call.1} parent=11 // pred_fallthru
          _
        // Predicated region
        $region37: #{tpu_custom_call.1} parent=11 // pred_check
          %p293 = pneg %p192
        $region38: #{tpu_custom_call.1} parent=11 // pred_check_branch
          %295 = sbr.rel (%p293) target = $region40
        $region39: #{tpu_custom_call.1} parent=11 // pred_region
          _
        $region40: #{tpu_custom_call.1} parent=11 // pred_fallthru
          _
        // Predicated region
        $region41: #{tpu_custom_call.1} parent=11 // pred_check
          %p296 = pneg %p213
        $region42: #{tpu_custom_call.1} parent=11 // pred_check_branch
          %298 = sbr.rel (%p296) target = $region44
        $region43: #{tpu_custom_call.1} parent=11 // pred_region
          _
        $region44: #{tpu_custom_call.1} parent=11 // pred_fallthru
          _
        // Predicated region
        $region45: #{tpu_custom_call.1} parent=11 // pred_check
          %p299 = pneg %p234
        $region46: #{tpu_custom_call.1} parent=11 // pred_check_branch
          %301 = sbr.rel (%p299) target = $region48
        $region47: #{tpu_custom_call.1} parent=11 // pred_region
          _
        $region48: #{tpu_custom_call.1} parent=11 // pred_fallthru
          _
      $region12: #{tpu_custom_call.1} parent=5 // pred_fallthru
        _
      %p302 = scmp.lt.s32.totalorder %s19, 2
      // Predicated region
      $region49: #{tpu_custom_call.1} parent=5 // pred_check
        %p303 = pneg %p302
      $region50: #{tpu_custom_call.1} parent=5 // pred_check_branch
        %305 = sbr.rel (%p303) target = $region52
      $region51: #{tpu_custom_call.1} parent=5 // pred_region
        // Predicated region
        $region53: #{tpu_custom_call.1} parent=51 // pred_check
          %p306 = pneg %p39
        $region54: #{tpu_custom_call.1} parent=51 // pred_check_branch
          %308 = sbr.rel (%p306) target = $region56
        $region55: #{tpu_custom_call.1} parent=51 // pred_region
          %s309 = smul.u32 8, %s19
          %p310 = scmp.lt.s32.totalorder %s309, 15
          %s311 = scalar_select %p310, %s309, 15
          %s312 = smul.addr %s311, 2
          %s313 = smul.addr %s312, 8
          %s314 = scalar_lea.vmem %s0, %s313
          %s315 = smul.u32 8, %s19
        $region56: #{tpu_custom_call.1} parent=51 // pred_fallthru
          _
      $region52: #{tpu_custom_call.1} parent=5 // pred_fallthru
        _
      %p316 = scmp.le.s32.totalorder 1, %s19
      %p317 = scmp.lt.s32.totalorder %s19, 3
      %p318 = pnand %p316, %p317
      %p319 = pneg %p318
      // Predicated region
      $region57: #{tpu_custom_call.1} parent=5 // pred_check
        _
      $region58: #{tpu_custom_call.1} parent=5 // pred_check_branch
        %321 = sbr.rel (%p318) target = $region60
      $region59: #{tpu_custom_call.1} parent=5 // pred_region
        %s322 = ssub.s32 %s19, 1
        %s323 = smul.u32 8, %s24
        %p324 = scmp.lt.s32.totalorder %s323, 15
        %s325 = scalar_select %p324, %s323, 15
        %s326 = smul.addr %s325, 2
        %s327 = smul.addr %s326, 8
        %s328 = scalar_lea.vmem %s0, %s327
        %p329 = pneg %p45
        %p330 = pneg %p42
        %p331 = pneg %p66
        %p332 = pneg %p63
        %p333 = pneg %p87
        %p334 = pneg %p84
        %p335 = pneg %p108
        %p336 = pneg %p105
        %p337 = pneg %p129
        %p338 = pneg %p126
        %p339 = pneg %p150
        %p340 = pneg %p147
        %p341 = pneg %p171
        %p342 = pneg %p168
        %p343 = pneg %p192
        %p344 = pneg %p189
        %p345 = pneg %p213
        %p346 = pneg %p210
        %p347 = pneg %p234
        %p348 = pneg %p231
        %p349 = pneg %p260
        %p350 = pneg %p257
        %s351 = sand.u32 %s247, 1
        %s352 = scalar_lea.sflag [#allocation3], %s351
        %s353 = sand.u32 %s247, 1
        %s354 = smul.addr %s353, 8
        %s355 = scalar_lea.vmem [#allocation2], %s354
        %s356 = smul.u32 8, %s24
        %p357 = scmp.lt.s32.totalorder %s356, 15
        %s358 = scalar_select %p357, %s356, 15
        %s359 = smul.addr %s358, 2
        %s360 = smul.addr %s359, 8
        %s361 = scalar_lea.vmem %s0, %s360
        %s362 = smul.u32 8, %s24
        %v363 = vld [vmem:[%s361] sm:$0xff]
        %v364 = vld [vmem:[%s361 + $0x8] sm:$0xff]
        %v365 = vld [vmem:[%s361 + $0x10] sm:$0xff]
        %v366 = vld [vmem:[%s361 + $0x18] sm:$0xff]
        %v367 = vld [vmem:[%s361 + $0x20] sm:$0xff]
        %v368 = vld [vmem:[%s361 + $0x28] sm:$0xff]
        %v369 = vld [vmem:[%s361 + $0x30] sm:$0xff]
        %v370 = vld [vmem:[%s361 + $0x38] sm:$0xff]
        %v371 = vld [vmem:[%s361 + $0x40] sm:$0xff]
        %v372 = vld [vmem:[%s361 + $0x48] sm:$0xff]
        %v373 = vld [vmem:[%s361 + $0x50] sm:$0xff]
        %v374 = vld [vmem:[%s361 + $0x58] sm:$0xff]
        %v375 = vld [vmem:[%s361 + $0x60] sm:$0xff]
        %v376 = vld [vmem:[%s361 + $0x68] sm:$0xff]
        %v377 = vld [vmem:[%s361 + $0x70] sm:$0xff]
        %v378 = vld [vmem:[%s361 + $0x78] sm:$0xff]
        %v379 = vld [vmem:[%s1] sm:$0xf]
        %v380 = vld [vmem:[%s2] sm:$0x1]
        %v382 = vlaneseq
        %v383 = vshrl.u32 %v382, 7
        %v384 = vsub.s32 0, %v383
        %v385 = vrot.slane %v380, %v384
        %vm387 = vcmask 31744
        %v389 = vsel %vm387, %v363, 0
        %v392 = vsel %vm387, %v364, 0
        %v395 = vsel %vm387, %v365, 0
        %v398 = vsel %vm387, %v366, 0
        %v401 = vsel %vm387, %v367, 0
        %v404 = vsel %vm387, %v368, 0
        %v407 = vsel %vm387, %v369, 0
        %v410 = vsel %vm387, %v370, 0
        %v413 = vsel %vm387, %v371, 0
        %v416 = vsel %vm387, %v372, 0
        %v419 = vsel %vm387, %v373, 0
        %v422 = vsel %vm387, %v374, 0
        %v425 = vsel %vm387, %v375, 0
        %v428 = vsel %vm387, %v376, 0
        %v431 = vsel %vm387, %v377, 0
        %v434 = vsel %vm387, %v378, 0
        %vm436 = vcmask 1043456
        %v438 = vsel %vm436, %v379, 0
        %440 = vmatprep.subr.mxu0 0.0
        %441 = vmatpush1.msra.mxu0 %v438
        %442 = vmatprep.subr.mxu0 0.0
        %443 = vmatpush1.msra.mxu0 0.0
        %444 = vmatprep.subr.mxu0 0.0
        %445 = vmatpush1.msra.mxu0 0.0
        %446 = vmatprep.subr.mxu0 0.0
        %447 = vmatpush1.msra.mxu0 0.0
        %448 = vmatprep.subr.mxu0 0.0
        %449 = vmatpush1.msra.mxu0 0.0
        %450 = vmatprep.subr.mxu0 0.0
        %451 = vmatpush1.msra.mxu0 0.0
        %452 = vmatprep.subr.mxu0 0.0
        %453 = vmatpush1.msra.mxu0 0.0
        %454 = vmatprep.subr.mxu0 0.0
        %455 = vmatpush1.msra.mxu0 0.0
        %456 = vmatprep.subr.mxu0 0.0
        %457 = vmatpush1.msra.mxu0 0.0
        %458 = vmatprep.subr.mxu0 0.0
        %459 = vmatpush1.msra.mxu0 0.0
        %460 = vmatprep.subr.mxu0 0.0
        %461 = vmatpush1.msra.mxu0 0.0
        %462 = vmatprep.subr.mxu0 0.0
        %463 = vmatpush1.msra.mxu0 0.0
        %464 = vmatprep.subr.mxu0 0.0
        %465 = vmatpush1.msra.mxu0 0.0
        %466 = vmatprep.subr.mxu0 0.0
        %467 = vmatpush1.msra.mxu0 0.0
        %468 = vmatprep.subr.mxu0 0.0
        %469 = vmatpush1.msra.mxu0 0.0
        %470 = vmatprep.subr.mxu0 0.0
        %471 = vmatpush1.msra.mxu0 0.0
        %472 = vmatprep.subr.mxu0 0.0
        %473 = vmatpush1.msra.mxu0 0.0
        %474 = vmatprep.subr.mxu0 0.0
        %475 = vmatpush1.msra.mxu0 0.0
        %476 = vmatprep.subr.mxu0 0.0
        %477 = vmatpush1.msra.mxu0 0.0
        %478 = vmatprep.subr.mxu0 0.0
        %479 = vmatpush1.msra.mxu0 0.0
        %480 = vmatprep.subr.mxu0 0.0
        %481 = vmatpush1.msra.mxu0 0.0
        %482 = vmatprep.subr.mxu0 0.0
        %483 = vmatpush1.msra.mxu0 0.0
        %484 = vmatprep.subr.mxu0 0.0
        %485 = vmatpush1.msra.mxu0 0.0
        %486 = vmatprep.subr.mxu0 0.0
        %487 = vmatpush1.msra.mxu0 0.0
        %488 = vmatprep.subr.mxu0 0.0
        %489 = vmatpush1.msra.mxu0 0.0
        %490 = vmatprep.subr.mxu0 0.0
        %491 = vmatpush1.msra.mxu0 0.0
        %492 = vmatprep.subr.mxu0 0.0
        %493 = vmatpush1.msra.mxu0 0.0
        %494 = vmatprep.subr.mxu0 0.0
        %495 = vmatpush1.msra.mxu0 0.0
        %496 = vmatprep.subr.mxu0 0.0
        %497 = vmatpush1.msra.mxu0 0.0
        %498 = vmatprep.subr.mxu0 0.0
        %499 = vmatpush1.msra.mxu0 0.0
        %500 = vmatprep.subr.mxu0 0.0
        %501 = vmatpush1.msra.mxu0 0.0
        %502 = vmatprep.subr.mxu0 0.0
        %503 = vmatpush1.msra.mxu0 0.0
        %504 = vmatprep.mubr.f32.mxu0 0.0
        %505 = vmatmul.mubr.f32.gmra.mrb[0].mxu0 %v389
        %v506 = vpop.f32.mrb[0].mxu0
        %v507 = vadd.f32 %v385, %v506
        %v508 = vpop.f32.mrb[0].mxu0
        %509 = vmatprep.mubr.f32.mxu0 0.0
        %510 = vmatmul.mubr.f32.gmra.mrb[0].mxu0 %v392
        %v511 = vpop.f32.mrb[0].mxu0
        %v512 = vadd.f32 %v385, %v511
        %v513 = vpop.f32.mrb[0].mxu0
        %514 = vmatprep.mubr.f32.mxu0 0.0
        %515 = vmatmul.mubr.f32.gmra.mrb[0].mxu0 %v395
        %v516 = vpop.f32.mrb[0].mxu0
        %v517 = vadd.f32 %v385, %v516
        %v518 = vpop.f32.mrb[0].mxu0
        %519 = vmatprep.mubr.f32.mxu0 0.0
        %520 = vmatmul.mubr.f32.gmra.mrb[0].mxu0 %v398
        %v521 = vpop.f32.mrb[0].mxu0
        %v522 = vadd.f32 %v385, %v521
        %v523 = vpop.f32.mrb[0].mxu0
        %524 = vmatprep.mubr.f32.mxu0 0.0
        %525 = vmatmul.mubr.f32.gmra.mrb[0].mxu0 %v401
        %v526 = vpop.f32.mrb[0].mxu0
        %v527 = vadd.f32 %v385, %v526
        %v528 = vpop.f32.mrb[0].mxu0
        %529 = vmatprep.mubr.f32.mxu0 0.0
        %530 = vmatmul.mubr.f32.gmra.mrb[0].mxu0 %v404
        %v531 = vpop.f32.mrb[0].mxu0
        %v532 = vadd.f32 %v385, %v531
        %v533 = vpop.f32.mrb[0].mxu0
        %534 = vmatprep.mubr.f32.mxu0 0.0
        %535 = vmatmul.mubr.f32.gmra.mrb[0].mxu0 %v407
        %v536 = vpop.f32.mrb[0].mxu0
        %v537 = vadd.f32 %v385, %v536
        %v538 = vpop.f32.mrb[0].mxu0
        %539 = vmatprep.mubr.f32.mxu0 0.0
        %540 = vmatmul.mubr.f32.gmra.mrb[0].mxu0 %v410
        %v541 = vpop.f32.mrb[0].mxu0
        %v542 = vadd.f32 %v385, %v541
        %v543 = vpop.f32.mrb[0].mxu0
        %544 = vmatprep.mubr.f32.mxu0 0.0
        %545 = vmatmul.mubr.f32.gmra.mrb[0].mxu0 %v413
        %v546 = vpop.f32.mrb[0].mxu0
        %v547 = vadd.f32 %v385, %v546
        %v548 = vpop.f32.mrb[0].mxu0
        %549 = vmatprep.mubr.f32.mxu0 0.0
        %550 = vmatmul.mubr.f32.gmra.mrb[0].mxu0 %v416
        %v551 = vpop.f32.mrb[0].mxu0
        %v552 = vadd.f32 %v385, %v551
        %v553 = vpop.f32.mrb[0].mxu0
        %554 = vmatprep.mubr.f32.mxu0 0.0
        %555 = vmatmul.mubr.f32.gmra.mrb[0].mxu0 %v419
        %v556 = vpop.f32.mrb[0].mxu0
        %v557 = vadd.f32 %v385, %v556
        %v558 = vpop.f32.mrb[0].mxu0
        %559 = vmatprep.mubr.f32.mxu0 0.0
        %560 = vmatmul.mubr.f32.gmra.mrb[0].mxu0 %v422
        %v561 = vpop.f32.mrb[0].mxu0
        %v562 = vadd.f32 %v385, %v561
        %v563 = vpop.f32.mrb[0].mxu0
        %564 = vmatprep.mubr.f32.mxu0 0.0
        %565 = vmatmul.mubr.f32.gmra.mrb[0].mxu0 %v425
        %v566 = vpop.f32.mrb[0].mxu0
        %v567 = vadd.f32 %v385, %v566
        %v568 = vpop.f32.mrb[0].mxu0
        %569 = vmatprep.mubr.f32.mxu0 0.0
        %570 = vmatmul.mubr.f32.gmra.mrb[0].mxu0 %v428
        %v571 = vpop.f32.mrb[0].mxu0
        %v572 = vadd.f32 %v385, %v571
        %v573 = vpop.f32.mrb[0].mxu0
        %574 = vmatprep.mubr.f32.mxu0 0.0
        %575 = vmatmul.mubr.f32.gmra.mrb[0].mxu0 %v431
        %v576 = vpop.f32.mrb[0].mxu0
        %v577 = vadd.f32 %v385, %v576
        %v578 = vpop.f32.mrb[0].mxu0
        %579 = vmatprep.mubr.f32.mxu0 0.0
        %580 = vmatmul.mubr.f32.gmra.mrb[0].mxu0 %v434
        %v581 = vpop.f32.mrb[0].mxu0
        %v582 = vadd.f32 %v385, %v581
        %v583 = vpop.f32.mrb[0].mxu0
        %584 = vdwg.mxu0
        %v585 = vmax.f32 %v507, 0.0
        %v586 = vmax.f32 %v512, 0.0
        %v587 = vmax.f32 %v517, 0.0
        %v588 = vmax.f32 %v522, 0.0
        %v589 = vmax.f32 %v527, 0.0
        %v590 = vmax.f32 %v532, 0.0
        %v591 = vmax.f32 %v537, 0.0
        %v592 = vmax.f32 %v542, 0.0
        %v593 = vmax.f32 %v547, 0.0
        %v594 = vmax.f32 %v552, 0.0
        %v595 = vmax.f32 %v557, 0.0
        %v596 = vmax.f32 %v562, 0.0
        %v597 = vmax.f32 %v567, 0.0
        %v598 = vmax.f32 %v572, 0.0
        %v599 = vmax.f32 %v577, 0.0
        %v600 = vmax.f32 %v582, 0.0
        %v601 = vld [vmem:[%s3] sm:$0xff]
        %v602 = vld [vmem:[%s3 + $0x8] sm:$0xff]
        %v603 = vld [vmem:[%s3 + $0x10] sm:$0xff]
        %v604 = vld [vmem:[%s3 + $0x18] sm:$0xff]
        %v605 = vld [vmem:[%s4] sm:$0x1]
        %v607 = vlaneseq
        %v608 = vshrl.u32 %v607, 7
        %v609 = vsub.s32 0, %v608
        %v610 = vrot.slane %v605, %v609
        %vm612 = vcmask 261120
        %v614 = vsel %vm612, %v585, 0
        %v617 = vsel %vm612, %v586, 0
        %v620 = vsel %vm612, %v587, 0
        %v623 = vsel %vm612, %v588, 0
        %v626 = vsel %vm612, %v589, 0
        %v629 = vsel %vm612, %v590, 0
        %v632 = vsel %vm612, %v591, 0
        %v635 = vsel %vm612, %v592, 0
        %v638 = vsel %vm612, %v593, 0
        %v641 = vsel %vm612, %v594, 0
        %v644 = vsel %vm612, %v595, 0
        %v647 = vsel %vm612, %v596, 0
        %v650 = vsel %vm612, %v597, 0
        %v653 = vsel %vm612, %v598, 0
        %v656 = vsel %vm612, %v599, 0
        %v659 = vsel %vm612, %v600, 0
        %661 = vmatprep.subr.mxu0 0.0
        %662 = vmatpush1.msra.mxu0 %v601
        %663 = vmatprep.subr.mxu0 0.0
        %664 = vmatpush1.msra.mxu0 %v602
        %665 = vmatprep.subr.mxu0 0.0
        %666 = vmatpush1.msra.mxu0 %v603
        %667 = vmatprep.subr.mxu0 0.0
        %668 = vmatpush1.msra.mxu0 %v604
        %669 = vmatprep.subr.mxu0 0.0
        %670 = vmatpush1.msra.mxu0 0.0
        %671 = vmatprep.subr.mxu0 0.0
        %672 = vmatpush1.msra.mxu0 0.0
        %673 = vmatprep.subr.mxu0 0.0
        %674 = vmatpush1.msra.mxu0 0.0
        %675 = vmatprep.subr.mxu0 0.0
        %676 = vmatpush1.msra.mxu0 0.0
        %677 = vmatprep.subr.mxu0 0.0
        %678 = vmatpush1.msra.mxu0 0.0
        %679 = vmatprep.subr.mxu0 0.0
        %680 = vmatpush1.msra.mxu0 0.0
        %681 = vmatprep.subr.mxu0 0.0
        %682 = vmatpush1.msra.mxu0 0.0
        %683 = vmatprep.subr.mxu0 0.0
        %684 = vmatpush1.msra.mxu0 0.0
        %685 = vmatprep.subr.mxu0 0.0
        %686 = vmatpush1.msra.mxu0 0.0
        %687 = vmatprep.subr.mxu0 0.0
        %688 = vmatpush1.msra.mxu0 0.0
        %689 = vmatprep.subr.mxu0 0.0
        %690 = vmatpush1.msra.mxu0 0.0
        %691 = vmatprep.subr.mxu0 0.0
        %692 = vmatpush1.msra.mxu0 0.0
        %693 = vmatprep.subr.mxu0 0.0
        %694 = vmatpush1.msra.mxu0 0.0
        %695 = vmatprep.subr.mxu0 0.0
        %696 = vmatpush1.msra.mxu0 0.0
        %697 = vmatprep.subr.mxu0 0.0
        %698 = vmatpush1.msra.mxu0 0.0
        %699 = vmatprep.subr.mxu0 0.0
        %700 = vmatpush1.msra.mxu0 0.0
        %701 = vmatprep.subr.mxu0 0.0
        %702 = vmatpush1.msra.mxu0 0.0
        %703 = vmatprep.subr.mxu0 0.0
        %704 = vmatpush1.msra.mxu0 0.0
        %705 = vmatprep.subr.mxu0 0.0
        %706 = vmatpush1.msra.mxu0 0.0
        %707 = vmatprep.subr.mxu0 0.0
        %708 = vmatpush1.msra.mxu0 0.0
        %709 = vmatprep.subr.mxu0 0.0
        %710 = vmatpush1.msra.mxu0 0.0
        %711 = vmatprep.subr.mxu0 0.0
        %712 = vmatpush1.msra.mxu0 0.0
        %713 = vmatprep.subr.mxu0 0.0
        %714 = vmatpush1.msra.mxu0 0.0
        %715 = vmatprep.subr.mxu0 0.0
        %716 = vmatpush1.msra.mxu0 0.0
        %717 = vmatprep.subr.mxu0 0.0
        %718 = vmatpush1.msra.mxu0 0.0
        %719 = vmatprep.subr.mxu0 0.0
        %720 = vmatpush1.msra.mxu0 0.0
        %721 = vmatprep.subr.mxu0 0.0
        %722 = vmatpush1.msra.mxu0 0.0
        %723 = vmatprep.subr.mxu0 0.0
        %724 = vmatpush1.msra.mxu0 0.0
        %725 = vmatprep.mubr.f32.mxu0 0.0
        %726 = vmatmul.mubr.f32.gmra.mrb[0].mxu0 %v614
        %v727 = vpop.f32.mrb[0].mxu0
        %v728 = vadd.f32 %v610, %v727
        %v729 = vpop.f32.mrb[0].mxu0
        %730 = vmatprep.mubr.f32.mxu0 0.0
        %731 = vmatmul.mubr.f32.gmra.mrb[0].mxu0 %v617
        %v732 = vpop.f32.mrb[0].mxu0
        %v733 = vadd.f32 %v610, %v732
        %v734 = vpop.f32.mrb[0].mxu0
        %735 = vmatprep.mubr.f32.mxu0 0.0
        %736 = vmatmul.mubr.f32.gmra.mrb[0].mxu0 %v620
        %v737 = vpop.f32.mrb[0].mxu0
        %v738 = vadd.f32 %v610, %v737
        %v739 = vpop.f32.mrb[0].mxu0
        %740 = vmatprep.mubr.f32.mxu0 0.0
        %741 = vmatmul.mubr.f32.gmra.mrb[0].mxu0 %v623
        %v742 = vpop.f32.mrb[0].mxu0
        %v743 = vadd.f32 %v610, %v742
        %v744 = vpop.f32.mrb[0].mxu0
        %745 = vmatprep.mubr.f32.mxu0 0.0
        %746 = vmatmul.mubr.f32.gmra.mrb[0].mxu0 %v626
        %v747 = vpop.f32.mrb[0].mxu0
        %v748 = vadd.f32 %v610, %v747
        %v749 = vpop.f32.mrb[0].mxu0
        %750 = vmatprep.mubr.f32.mxu0 0.0
        %751 = vmatmul.mubr.f32.gmra.mrb[0].mxu0 %v629
        %v752 = vpop.f32.mrb[0].mxu0
        %v753 = vadd.f32 %v610, %v752
        %v754 = vpop.f32.mrb[0].mxu0
        %755 = vmatprep.mubr.f32.mxu0 0.0
        %756 = vmatmul.mubr.f32.gmra.mrb[0].mxu0 %v632
        %v757 = vpop.f32.mrb[0].mxu0
        %v758 = vadd.f32 %v610, %v757
        %v759 = vpop.f32.mrb[0].mxu0
        %760 = vmatprep.mubr.f32.mxu0 0.0
        %761 = vmatmul.mubr.f32.gmra.mrb[0].mxu0 %v635
        %v762 = vpop.f32.mrb[0].mxu0
        %v763 = vadd.f32 %v610, %v762
        %v764 = vpop.f32.mrb[0].mxu0
        %765 = vmatprep.mubr.f32.mxu0 0.0
        %766 = vmatmul.mubr.f32.gmra.mrb[0].mxu0 %v638
        %v767 = vpop.f32.mrb[0].mxu0
        %v768 = vadd.f32 %v610, %v767
        %v769 = vpop.f32.mrb[0].mxu0
        %770 = vmatprep.mubr.f32.mxu0 0.0
        %771 = vmatmul.mubr.f32.gmra.mrb[0].mxu0 %v641
        %v772 = vpop.f32.mrb[0].mxu0
        %v773 = vadd.f32 %v610, %v772
        %v774 = vpop.f32.mrb[0].mxu0
        %775 = vmatprep.mubr.f32.mxu0 0.0
        %776 = vmatmul.mubr.f32.gmra.mrb[0].mxu0 %v644
        %v777 = vpop.f32.mrb[0].mxu0
        %v778 = vadd.f32 %v610, %v777
        %v779 = vpop.f32.mrb[0].mxu0
        %780 = vmatprep.mubr.f32.mxu0 0.0
        %781 = vmatmul.mubr.f32.gmra.mrb[0].mxu0 %v647
        %v782 = vpop.f32.mrb[0].mxu0
        %v783 = vadd.f32 %v610, %v782
        %v784 = vpop.f32.mrb[0].mxu0
        %785 = vmatprep.mubr.f32.mxu0 0.0
        %786 = vmatmul.mubr.f32.gmra.mrb[0].mxu0 %v650
        %v787 = vpop.f32.mrb[0].mxu0
        %v788 = vadd.f32 %v610, %v787
        %v789 = vpop.f32.mrb[0].mxu0
        %790 = vmatprep.mubr.f32.mxu0 0.0
        %791 = vmatmul.mubr.f32.gmra.mrb[0].mxu0 %v653
        %v792 = vpop.f32.mrb[0].mxu0
        %v793 = vadd.f32 %v610, %v792
        %v794 = vpop.f32.mrb[0].mxu0
        %795 = vmatprep.mubr.f32.mxu0 0.0
        %796 = vmatmul.mubr.f32.gmra.mrb[0].mxu0 %v656
        %v797 = vpop.f32.mrb[0].mxu0
        %v798 = vadd.f32 %v610, %v797
        %v799 = vpop.f32.mrb[0].mxu0
        %800 = vmatprep.mubr.f32.mxu0 0.0
        %801 = vmatmul.mubr.f32.gmra.mrb[0].mxu0 %v659
        %v802 = vpop.f32.mrb[0].mxu0
        %v803 = vadd.f32 %v610, %v802
        %v804 = vpop.f32.mrb[0].mxu0
        %805 = vdwg.mxu0
        %vm806 = vcmask 130048
        %v807 = vsel %vm806, %v728, -inf
        %v808 = vsel %vm806, %v733, -inf
        %v809 = vmax.f32 %v807, %v808
        %v810 = vrot.slane %v809, 4
        %v811 = vmax.f32 %v809, %v810
        %v812 = vrot.slane %v811, 2
        %v813 = vmax.f32 %v811, %v812
        %v814 = vrot.slane %v813, 1
        %v815 = vmax.f32 %v813, %v814
        %v816 = vsel %vm806, %v738, -inf
        %v817 = vsel %vm806, %v743, -inf
        %v818 = vmax.f32 %v816, %v817
        %v819 = vrot.slane %v818, 4
        %v820 = vmax.f32 %v818, %v819
        %v821 = vrot.slane %v820, 2
        %v822 = vmax.f32 %v820, %v821
        %v823 = vrot.slane %v822, 1
        %v824 = vmax.f32 %v822, %v823
        %v825 = vsel %vm806, %v748, -inf
        %v826 = vsel %vm806, %v753, -inf
        %v827 = vmax.f32 %v825, %v826
        %v828 = vrot.slane %v827, 4
        %v829 = vmax.f32 %v827, %v828
        %v830 = vrot.slane %v829, 2
        %v831 = vmax.f32 %v829, %v830
        %v832 = vrot.slane %v831, 1
        %v833 = vmax.f32 %v831, %v832
        %v834 = vsel %vm806, %v758, -inf
        %v835 = vsel %vm806, %v763, -inf
        %v836 = vmax.f32 %v834, %v835
        %v837 = vrot.slane %v836, 4
        %v838 = vmax.f32 %v836, %v837
        %v839 = vrot.slane %v838, 2
        %v840 = vmax.f32 %v838, %v839
        %v841 = vrot.slane %v840, 1
        %v842 = vmax.f32 %v840, %v841
        %v843 = vsel %vm806, %v768, -inf
        %v844 = vsel %vm806, %v773, -inf
        %v845 = vmax.f32 %v843, %v844
        %v846 = vrot.slane %v845, 4
        %v847 = vmax.f32 %v845, %v846
        %v848 = vrot.slane %v847, 2
        %v849 = vmax.f32 %v847, %v848
        %v850 = vrot.slane %v849, 1
        %v851 = vmax.f32 %v849, %v850
        %v852 = vsel %vm806, %v778, -inf
        %v853 = vsel %vm806, %v783, -inf
        %v854 = vmax.f32 %v852, %v853
        %v855 = vrot.slane %v854, 4
        %v856 = vmax.f32 %v854, %v855
        %v857 = vrot.slane %v856, 2
        %v858 = vmax.f32 %v856, %v857
        %v859 = vrot.slane %v858, 1
        %v860 = vmax.f32 %v858, %v859
        %v861 = vsel %vm806, %v788, -inf
        %v862 = vsel %vm806, %v793, -inf
        %v863 = vmax.f32 %v861, %v862
        %v864 = vrot.slane %v863, 4
        %v865 = vmax.f32 %v863, %v864
        %v866 = vrot.slane %v865, 2
        %v867 = vmax.f32 %v865, %v866
        %v868 = vrot.slane %v867, 1
        %v869 = vmax.f32 %v867, %v868
        %v870 = vsel %vm806, %v798, -inf
        %v871 = vsel %vm806, %v803, -inf
        %v872 = vmax.f32 %v870, %v871
        %v873 = vrot.slane %v872, 4
        %v874 = vmax.f32 %v872, %v873
        %v875 = vrot.slane %v874, 2
        %v876 = vmax.f32 %v874, %v875
        %v877 = vrot.slane %v876, 1
        %v878 = vmax.f32 %v876, %v877
        %v879 = vld [vmem:[%s6] sm:$0xff]
        %v880 = vld [vmem:[%s6 + $0x8] sm:$0xff]
        %v882 = vsel %vm806, %v728, 0
        %v885 = vsel %vm806, %v733, 0
        %v888 = vsel %vm806, %v738, 0
        %v891 = vsel %vm806, %v743, 0
        %v894 = vsel %vm806, %v748, 0
        %v897 = vsel %vm806, %v753, 0
        %v900 = vsel %vm806, %v758, 0
        %v903 = vsel %vm806, %v763, 0
        %v906 = vsel %vm806, %v768, 0
        %v909 = vsel %vm806, %v773, 0
        %v912 = vsel %vm806, %v778, 0
        %v915 = vsel %vm806, %v783, 0
        %v918 = vsel %vm806, %v788, 0
        %v921 = vsel %vm806, %v793, 0
        %v924 = vsel %vm806, %v798, 0
        %v927 = vsel %vm806, %v803, 0
        %929 = vmatprep.subr.mxu0 0.0
        %930 = vmatpush1.msra.mxu0 %v879
        %931 = vmatprep.subr.mxu0 0.0
        %932 = vmatpush1.msra.mxu0 %v880
        %933 = vmatprep.subr.mxu0 0.0
        %934 = vmatpush1.msra.mxu0 0.0
        %935 = vmatprep.subr.mxu0 0.0
        %936 = vmatpush1.msra.mxu0 0.0
        %937 = vmatprep.subr.mxu0 0.0
        %938 = vmatpush1.msra.mxu0 0.0
        %939 = vmatprep.subr.mxu0 0.0
        %940 = vmatpush1.msra.mxu0 0.0
        %941 = vmatprep.subr.mxu0 0.0
        %942 = vmatpush1.msra.mxu0 0.0
        %943 = vmatprep.subr.mxu0 0.0
        %944 = vmatpush1.msra.mxu0 0.0
        %945 = vmatprep.subr.mxu0 0.0
        %946 = vmatpush1.msra.mxu0 0.0
        %947 = vmatprep.subr.mxu0 0.0
        %948 = vmatpush1.msra.mxu0 0.0
        %949 = vmatprep.subr.mxu0 0.0
        %950 = vmatpush1.msra.mxu0 0.0
        %951 = vmatprep.subr.mxu0 0.0
        %952 = vmatpush1.msra.mxu0 0.0
        %953 = vmatprep.subr.mxu0 0.0
        %954 = vmatpush1.msra.mxu0 0.0
        %955 = vmatprep.subr.mxu0 0.0
        %956 = vmatpush1.msra.mxu0 0.0
        %957 = vmatprep.subr.mxu0 0.0
        %958 = vmatpush1.msra.mxu0 0.0
        %959 = vmatprep.subr.mxu0 0.0
        %960 = vmatpush1.msra.mxu0 0.0
        %961 = vmatprep.subr.mxu0 0.0
        %962 = vmatpush1.msra.mxu0 0.0
        %963 = vmatprep.subr.mxu0 0.0
        %964 = vmatpush1.msra.mxu0 0.0
        %965 = vmatprep.subr.mxu0 0.0
        %966 = vmatpush1.msra.mxu0 0.0
        %967 = vmatprep.subr.mxu0 0.0
        %968 = vmatpush1.msra.mxu0 0.0
        %969 = vmatprep.subr.mxu0 0.0
        %970 = vmatpush1.msra.mxu0 0.0
        %971 = vmatprep.subr.mxu0 0.0
        %972 = vmatpush1.msra.mxu0 0.0
        %973 = vmatprep.subr.mxu0 0.0
        %974 = vmatpush1.msra.mxu0 0.0
        %975 = vmatprep.subr.mxu0 0.0
        %976 = vmatpush1.msra.mxu0 0.0
        %977 = vmatprep.subr.mxu0 0.0
        %978 = vmatpush1.msra.mxu0 0.0
        %979 = vmatprep.subr.mxu0 0.0
        %980 = vmatpush1.msra.mxu0 0.0
        %981 = vmatprep.subr.mxu0 0.0
        %982 = vmatpush1.msra.mxu0 0.0
        %983 = vmatprep.subr.mxu0 0.0
        %984 = vmatpush1.msra.mxu0 0.0
        %985 = vmatprep.subr.mxu0 0.0
        %986 = vmatpush1.msra.mxu0 0.0
        %987 = vmatprep.subr.mxu0 0.0
        %988 = vmatpush1.msra.mxu0 0.0
        %989 = vmatprep.subr.mxu0 0.0
        %990 = vmatpush1.msra.mxu0 0.0
        %991 = vmatprep.subr.mxu0 0.0
        %992 = vmatpush1.msra.mxu0 0.0
        %993 = vmatprep.mubr.f32.mxu0 0.0
        %994 = vmatmul.mubr.f32.gmra.mrb[0].mxu0 %v882
        %v995 = vpop.f32.mrb[0].mxu0
        %v996 = vadd.f32 0.0, %v995
        %v997 = vpop.f32.mrb[0].mxu0
        %998 = vmatprep.mubr.f32.mxu0 0.0
        %999 = vmatmul.mubr.f32.gmra.mrb[0].mxu0 %v885
        %v1000 = vpop.f32.mrb[0].mxu0
        %v1001 = vadd.f32 0.0, %v1000
        %v1002 = vpop.f32.mrb[0].mxu0
        %1003 = vmatprep.mubr.f32.mxu0 0.0
        %1004 = vmatmul.mubr.f32.gmra.mrb[0].mxu0 %v888
        %v1005 = vpop.f32.mrb[0].mxu0
        %v1006 = vadd.f32 0.0, %v1005
        %v1007 = vpop.f32.mrb[0].mxu0
        %1008 = vmatprep.mubr.f32.mxu0 0.0
        %1009 = vmatmul.mubr.f32.gmra.mrb[0].mxu0 %v891
        %v1010 = vpop.f32.mrb[0].mxu0
        %v1011 = vadd.f32 0.0, %v1010
        %v1012 = vpop.f32.mrb[0].mxu0
        %1013 = vmatprep.mubr.f32.mxu0 0.0
        %1014 = vmatmul.mubr.f32.gmra.mrb[0].mxu0 %v894
        %v1015 = vpop.f32.mrb[0].mxu0
        %v1016 = vadd.f32 0.0, %v1015
        %v1017 = vpop.f32.mrb[0].mxu0
        %1018 = vmatprep.mubr.f32.mxu0 0.0
        %1019 = vmatmul.mubr.f32.gmra.mrb[0].mxu0 %v897
        %v1020 = vpop.f32.mrb[0].mxu0
        %v1021 = vadd.f32 0.0, %v1020
        %v1022 = vpop.f32.mrb[0].mxu0
        %1023 = vmatprep.mubr.f32.mxu0 0.0
        %1024 = vmatmul.mubr.f32.gmra.mrb[0].mxu0 %v900
        %v1025 = vpop.f32.mrb[0].mxu0
        %v1026 = vadd.f32 0.0, %v1025
        %v1027 = vpop.f32.mrb[0].mxu0
        %1028 = vmatprep.mubr.f32.mxu0 0.0
        %1029 = vmatmul.mubr.f32.gmra.mrb[0].mxu0 %v903
        %v1030 = vpop.f32.mrb[0].mxu0
        %v1031 = vadd.f32 0.0, %v1030
        %v1032 = vpop.f32.mrb[0].mxu0
        %1033 = vmatprep.mubr.f32.mxu0 0.0
        %1034 = vmatmul.mubr.f32.gmra.mrb[0].mxu0 %v906
        %v1035 = vpop.f32.mrb[0].mxu0
        %v1036 = vadd.f32 0.0, %v1035
        %v1037 = vpop.f32.mrb[0].mxu0
        %1038 = vmatprep.mubr.f32.mxu0 0.0
        %1039 = vmatmul.mubr.f32.gmra.mrb[0].mxu0 %v909
        %v1040 = vpop.f32.mrb[0].mxu0
        %v1041 = vadd.f32 0.0, %v1040
        %v1042 = vpop.f32.mrb[0].mxu0
        %1043 = vmatprep.mubr.f32.mxu0 0.0
        %1044 = vmatmul.mubr.f32.gmra.mrb[0].mxu0 %v912
        %v1045 = vpop.f32.mrb[0].mxu0
        %v1046 = vadd.f32 0.0, %v1045
        %v1047 = vpop.f32.mrb[0].mxu0
        %1048 = vmatprep.mubr.f32.mxu0 0.0
        %1049 = vmatmul.mubr.f32.gmra.mrb[0].mxu0 %v915
        %v1050 = vpop.f32.mrb[0].mxu0
        %v1051 = vadd.f32 0.0, %v1050
        %v1052 = vpop.f32.mrb[0].mxu0
        %1053 = vmatprep.mubr.f32.mxu0 0.0
        %1054 = vmatmul.mubr.f32.gmra.mrb[0].mxu0 %v918
        %v1055 = vpop.f32.mrb[0].mxu0
        %v1056 = vadd.f32 0.0, %v1055
        %v1057 = vpop.f32.mrb[0].mxu0
        %1058 = vmatprep.mubr.f32.mxu0 0.0
        %1059 = vmatmul.mubr.f32.gmra.mrb[0].mxu0 %v921
        %v1060 = vpop.f32.mrb[0].mxu0
        %v1061 = vadd.f32 0.0, %v1060
        %v1062 = vpop.f32.mrb[0].mxu0
        %1063 = vmatprep.mubr.f32.mxu0 0.0
        %1064 = vmatmul.mubr.f32.gmra.mrb[0].mxu0 %v924
        %v1065 = vpop.f32.mrb[0].mxu0
        %v1066 = vadd.f32 0.0, %v1065
        %v1067 = vpop.f32.mrb[0].mxu0
        %1068 = vmatprep.mubr.f32.mxu0 0.0
        %1069 = vmatmul.mubr.f32.gmra.mrb[0].mxu0 %v927
        %v1070 = vpop.f32.mrb[0].mxu0
        %v1071 = vadd.f32 0.0, %v1070
        %v1072 = vpop.f32.mrb[0].mxu0
        %1073 = vdwg.mxu0
        %v1074 = vld [vmem:[%s5] sm:$0xff]
        %v1075 = vld [vmem:[%s5 + $0x8] sm:$0xff]
        %vm1084 = vcmask 1041409
        %v1085 = vsel %vm1084, %v824, %v815
        %vm1086 = vcmask 1042434
        %v1087 = vsel %vm1086, %v833, %v1085
        %vm1088 = vcmask 1043459
        %v1089 = vsel %vm1088, %v842, %v1087
        %vm1090 = vcmask 1044484
        %v1091 = vsel %vm1090, %v851, %v1089
        %vm1092 = vcmask 1045509
        %v1093 = vsel %vm1092, %v860, %v1091
        %vm1094 = vcmask 1046534
        %v1095 = vsel %vm1094, %v869, %v1093
        %vm1096 = vcmask 1047559
        %v1097 = vsel %vm1096, %v878, %v1095
        %v1098 = vsel %vm806, %v1097, 0
        %1100 = vmatprep.subr.mxu0 0.0
        %1101 = vmatpush1.msra.mxu0 %v1074
        %1102 = vmatprep.subr.mxu0 0.0
        %1103 = vmatpush1.msra.mxu0 %v1075
        %1104 = vmatprep.subr.mxu0 0.0
        %1105 = vmatpush1.msra.mxu0 0.0
        %1106 = vmatprep.subr.mxu0 0.0
        %1107 = vmatpush1.msra.mxu0 0.0
        %1108 = vmatprep.subr.mxu0 0.0
        %1109 = vmatpush1.msra.mxu0 0.0
        %1110 = vmatprep.subr.mxu0 0.0
        %1111 = vmatpush1.msra.mxu0 0.0
        %1112 = vmatprep.subr.mxu0 0.0
        %1113 = vmatpush1.msra.mxu0 0.0
        %1114 = vmatprep.subr.mxu0 0.0
        %1115 = vmatpush1.msra.mxu0 0.0
        %1116 = vmatprep.subr.mxu0 0.0
        %1117 = vmatpush1.msra.mxu0 0.0
        %1118 = vmatprep.subr.mxu0 0.0
        %1119 = vmatpush1.msra.mxu0 0.0
        %1120 = vmatprep.subr.mxu0 0.0
        %1121 = vmatpush1.msra.mxu0 0.0
        %1122 = vmatprep.subr.mxu0 0.0
        %1123 = vmatpush1.msra.mxu0 0.0
        %1124 = vmatprep.subr.mxu0 0.0
        %1125 = vmatpush1.msra.mxu0 0.0
        %1126 = vmatprep.subr.mxu0 0.0
        %1127 = vmatpush1.msra.mxu0 0.0
        %1128 = vmatprep.subr.mxu0 0.0
        %1129 = vmatpush1.msra.mxu0 0.0
        %1130 = vmatprep.subr.mxu0 0.0
        %1131 = vmatpush1.msra.mxu0 0.0
        %1132 = vmatprep.subr.mxu0 0.0
        %1133 = vmatpush1.msra.mxu0 0.0
        %1134 = vmatprep.subr.mxu0 0.0
        %1135 = vmatpush1.msra.mxu0 0.0
        %1136 = vmatprep.subr.mxu0 0.0
        %1137 = vmatpush1.msra.mxu0 0.0
        %1138 = vmatprep.subr.mxu0 0.0
        %1139 = vmatpush1.msra.mxu0 0.0
        %1140 = vmatprep.subr.mxu0 0.0
        %1141 = vmatpush1.msra.mxu0 0.0
        %1142 = vmatprep.subr.mxu0 0.0
        %1143 = vmatpush1.msra.mxu0 0.0
        %1144 = vmatprep.subr.mxu0 0.0
        %1145 = vmatpush1.msra.mxu0 0.0
        %1146 = vmatprep.subr.mxu0 0.0
        %1147 = vmatpush1.msra.mxu0 0.0
        %1148 = vmatprep.subr.mxu0 0.0
        %1149 = vmatpush1.msra.mxu0 0.0
        %1150 = vmatprep.subr.mxu0 0.0
        %1151 = vmatpush1.msra.mxu0 0.0
        %1152 = vmatprep.subr.mxu0 0.0
        %1153 = vmatpush1.msra.mxu0 0.0
        %1154 = vmatprep.subr.mxu0 0.0
        %1155 = vmatpush1.msra.mxu0 0.0
        %1156 = vmatprep.subr.mxu0 0.0
        %1157 = vmatpush1.msra.mxu0 0.0
        %1158 = vmatprep.subr.mxu0 0.0
        %1159 = vmatpush1.msra.mxu0 0.0
        %1160 = vmatprep.subr.mxu0 0.0
        %1161 = vmatpush1.msra.mxu0 0.0
        %1162 = vmatprep.subr.mxu0 0.0
        %1163 = vmatpush1.msra.mxu0 0.0
        %1164 = vmatprep.mubr.f32.mxu0 0.0
        %1165 = vmatmul.mubr.f32.gmra.mrb[0].mxu0 %v1098
        %v1166 = vpop.f32.mrb[0].mxu0
        %v1167 = vadd.f32 0.0, %v1166
        %v1168 = vpop.f32.mrb[0].mxu0
        %1169 = vdwg.mxu0
        %v1171 = vcombine.high %v1167, %v1167
        %v1173 = vunpack.c.l.s4 1966171168
        %v1174 = vunpack.c.0.s8 %v1173
        %v1175 = vlaneseq
        %v1176 = vshrl.u32 %v1175, 7
        %v1177 = vsub.s32 %v1174, %v1176
        %v1178 = vrot.slane %v1167, %v1177
        %v1180 = vunpack.c.l.s4 1966171168
        %v1181 = vunpack.c.0.s8 %v1180
        %v1182 = vlaneseq
        %v1183 = vshrl.u32 %v1182, 7
        %v1184 = vsub.s32 %v1181, %v1183
        %v1185 = vrot.slane %v1171, %v1184
        %v1186 = vcombine.high %v1178, %v1178
        %v1187 = vcombine.high %v1185, %v1185
        %v1189 = vunpack.c.l.s4 1966171168
        %v1190 = vunpack.c.0.s8 %v1189
        %v1191 = vlaneseq
        %v1192 = vshrl.u32 %v1191, 7
        %v1193 = vsub.s32 %v1190, %v1192
        %v1194 = vrot.slane %v1178, %v1193
        %v1196 = vunpack.c.l.s4 1966171168
        %v1197 = vunpack.c.0.s8 %v1196
        %v1198 = vlaneseq
        %v1199 = vshrl.u32 %v1198, 7
        %v1200 = vsub.s32 %v1197, %v1199
        %v1201 = vrot.slane %v1185, %v1200
        %v1203 = vunpack.c.l.s4 1966171168
        %v1204 = vunpack.c.0.s8 %v1203
        %v1205 = vlaneseq
        %v1206 = vshrl.u32 %v1205, 7
        %v1207 = vsub.s32 %v1204, %v1206
        %v1208 = vrot.slane %v1186, %v1207
        %v1210 = vunpack.c.l.s4 1966171168
        %v1211 = vunpack.c.0.s8 %v1210
        %v1212 = vlaneseq
        %v1213 = vshrl.u32 %v1212, 7
        %v1214 = vsub.s32 %v1211, %v1213
        %v1215 = vrot.slane %v1187, %v1214
        %v1216 = vcombine.high %v1194, %v1194
        %v1217 = vcombine.high %v1201, %v1201
        %v1218 = vcombine.high %v1208, %v1208
        %v1219 = vcombine.high %v1215, %v1215
        %v1220 = vlaneseq
        %v1221 = vshrl.u32 %v1220, 7
        %v1222 = vsub.s32 0, %v1221
        %v1223 = vrot.slane %v1194, %v1222
        %v1224 = vlaneseq
        %v1225 = vshrl.u32 %v1224, 7
        %v1226 = vsub.s32 0, %v1225
        %v1227 = vrot.slane %v1208, %v1226
        %v1228 = vlaneseq
        %v1229 = vshrl.u32 %v1228, 7
        %v1230 = vsub.s32 0, %v1229
        %v1231 = vrot.slane %v1216, %v1230
        %v1232 = vlaneseq
        %v1233 = vshrl.u32 %v1232, 7
        %v1234 = vsub.s32 0, %v1233
        %v1235 = vrot.slane %v1218, %v1234
        %v1236 = vlaneseq
        %v1237 = vshrl.u32 %v1236, 7
        %v1238 = vsub.s32 0, %v1237
        %v1239 = vrot.slane %v1201, %v1238
        %v1240 = vlaneseq
        %v1241 = vshrl.u32 %v1240, 7
        %v1242 = vsub.s32 0, %v1241
        %v1243 = vrot.slane %v1215, %v1242
        %v1244 = vlaneseq
        %v1245 = vshrl.u32 %v1244, 7
        %v1246 = vsub.s32 0, %v1245
        %v1247 = vrot.slane %v1217, %v1246
        %v1248 = vlaneseq
        %v1249 = vshrl.u32 %v1248, 7
        %v1250 = vsub.s32 0, %v1249
        %v1251 = vrot.slane %v1219, %v1250
        %v1260 = vadd.f32 %v996, %v1223
        %v1261 = vadd.f32 %v1001, %v1223
        %v1262 = vadd.f32 %v1006, %v1227
        %v1263 = vadd.f32 %v1011, %v1227
        %v1264 = vadd.f32 %v1016, %v1231
        %v1265 = vadd.f32 %v1021, %v1231
        %v1266 = vadd.f32 %v1026, %v1235
        %v1267 = vadd.f32 %v1031, %v1235
        %v1268 = vadd.f32 %v1036, %v1239
        %v1269 = vadd.f32 %v1041, %v1239
        %v1270 = vadd.f32 %v1046, %v1243
        %v1271 = vadd.f32 %v1051, %v1243
        %v1272 = vadd.f32 %v1056, %v1247
        %v1273 = vadd.f32 %v1061, %v1247
        %v1274 = vadd.f32 %v1066, %v1251
        %v1275 = vadd.f32 %v1071, %v1251
        %v1276 = vld [vmem:[%s7] sm:$0x1]
        %v1278 = vlaneseq
        %v1279 = vshrl.u32 %v1278, 7
        %v1280 = vsub.s32 0, %v1279
        %v1281 = vrot.slane %v1276, %v1280
        %v1283 = vadd.f32 %v1260, %v1281
        %v1284 = vadd.f32 %v1261, %v1281
        %v1285 = vadd.f32 %v1262, %v1281
        %v1286 = vadd.f32 %v1263, %v1281
        %v1287 = vadd.f32 %v1264, %v1281
        %v1288 = vadd.f32 %v1265, %v1281
        %v1289 = vadd.f32 %v1266, %v1281
        %v1290 = vadd.f32 %v1267, %v1281
        %v1291 = vadd.f32 %v1268, %v1281
        %v1292 = vadd.f32 %v1269, %v1281
        %v1293 = vadd.f32 %v1270, %v1281
        %v1294 = vadd.f32 %v1271, %v1281
        %v1295 = vadd.f32 %v1272, %v1281
        %v1296 = vadd.f32 %v1273, %v1281
        %v1297 = vadd.f32 %v1274, %v1281
        %v1298 = vadd.f32 %v1275, %v1281
        %v1299 = vmax.f32 %v1283, 0.0
        %v1300 = vmax.f32 %v1284, 0.0
        %v1301 = vmax.f32 %v1285, 0.0
        %v1302 = vmax.f32 %v1286, 0.0
        %v1303 = vmax.f32 %v1287, 0.0
        %v1304 = vmax.f32 %v1288, 0.0
        %v1305 = vmax.f32 %v1289, 0.0
        %v1306 = vmax.f32 %v1290, 0.0
        %v1307 = vmax.f32 %v1291, 0.0
        %v1308 = vmax.f32 %v1292, 0.0
        %v1309 = vmax.f32 %v1293, 0.0
        %v1310 = vmax.f32 %v1294, 0.0
        %v1311 = vmax.f32 %v1295, 0.0
        %v1312 = vmax.f32 %v1296, 0.0
        %v1313 = vmax.f32 %v1297, 0.0
        %v1314 = vmax.f32 %v1298, 0.0
        %v1315 = vld [vmem:[%s8] sm:$0xff]
        %v1316 = vld [vmem:[%s8 + $0x8] sm:$0xff]
        %v1317 = vld [vmem:[%s8 + $0x10] sm:$0xff]
        %v1318 = vld [vmem:[%s8 + $0x18] sm:$0xff]
        %v1319 = vld [vmem:[%s9] sm:$0x1]
        %v1321 = vlaneseq
        %v1322 = vshrl.u32 %v1321, 7
        %v1323 = vsub.s32 0, %v1322
        %v1324 = vrot.slane %v1319, %v1323
        %v1327 = vsel %vm612, %v1299, 0
        %v1330 = vsel %vm612, %v1300, 0
        %v1333 = vsel %vm612, %v1301, 0
        %v1336 = vsel %vm612, %v1302, 0
        %v1339 = vsel %vm612, %v1303, 0
        %v1342 = vsel %vm612, %v1304, 0
        %v1345 = vsel %vm612, %v1305, 0
        %v1348 = vsel %vm612, %v1306, 0
        %v1351 = vsel %vm612, %v1307, 0
        %v1354 = vsel %vm612, %v1308, 0
        %v1357 = vsel %vm612, %v1309, 0
        %v1360 = vsel %vm612, %v1310, 0
        %v1363 = vsel %vm612, %v1311, 0
        %v1366 = vsel %vm612, %v1312, 0
        %v1369 = vsel %vm612, %v1313, 0
        %v1372 = vsel %vm612, %v1314, 0
        %1374 = vmatprep.subr.mxu0 0.0
        %1375 = vmatpush1.msra.mxu0 %v1315
        %1376 = vmatprep.subr.mxu0 0.0
        %1377 = vmatpush1.msra.mxu0 %v1316
        %1378 = vmatprep.subr.mxu0 0.0
        %1379 = vmatpush1.msra.mxu0 %v1317
        %1380 = vmatprep.subr.mxu0 0.0
        %1381 = vmatpush1.msra.mxu0 %v1318
        %1382 = vmatprep.subr.mxu0 0.0
        %1383 = vmatpush1.msra.mxu0 0.0
        %1384 = vmatprep.subr.mxu0 0.0
        %1385 = vmatpush1.msra.mxu0 0.0
        %1386 = vmatprep.subr.mxu0 0.0
        %1387 = vmatpush1.msra.mxu0 0.0
        %1388 = vmatprep.subr.mxu0 0.0
        %1389 = vmatpush1.msra.mxu0 0.0
        %1390 = vmatprep.subr.mxu0 0.0
        %1391 = vmatpush1.msra.mxu0 0.0
        %1392 = vmatprep.subr.mxu0 0.0
        %1393 = vmatpush1.msra.mxu0 0.0
        %1394 = vmatprep.subr.mxu0 0.0
        %1395 = vmatpush1.msra.mxu0 0.0
        %1396 = vmatprep.subr.mxu0 0.0
        %1397 = vmatpush1.msra.mxu0 0.0
        %1398 = vmatprep.subr.mxu0 0.0
        %1399 = vmatpush1.msra.mxu0 0.0
        %1400 = vmatprep.subr.mxu0 0.0
        %1401 = vmatpush1.msra.mxu0 0.0
        %1402 = vmatprep.subr.mxu0 0.0
        %1403 = vmatpush1.msra.mxu0 0.0
        %1404 = vmatprep.subr.mxu0 0.0
        %1405 = vmatpush1.msra.mxu0 0.0
        %1406 = vmatprep.subr.mxu0 0.0
        %1407 = vmatpush1.msra.mxu0 0.0
        %1408 = vmatprep.subr.mxu0 0.0
        %1409 = vmatpush1.msra.mxu0 0.0
        %1410 = vmatprep.subr.mxu0 0.0
        %1411 = vmatpush1.msra.mxu0 0.0
        %1412 = vmatprep.subr.mxu0 0.0
        %1413 = vmatpush1.msra.mxu0 0.0
        %1414 = vmatprep.subr.mxu0 0.0
        %1415 = vmatpush1.msra.mxu0 0.0
        %1416 = vmatprep.subr.mxu0 0.0
        %1417 = vmatpush1.msra.mxu0 0.0
        %1418 = vmatprep.subr.mxu0 0.0
        %1419 = vmatpush1.msra.mxu0 0.0
        %1420 = vmatprep.subr.mxu0 0.0
        %1421 = vmatpush1.msra.mxu0 0.0
        %1422 = vmatprep.subr.mxu0 0.0
        %1423 = vmatpush1.msra.mxu0 0.0
        %1424 = vmatprep.subr.mxu0 0.0
        %1425 = vmatpush1.msra.mxu0 0.0
        %1426 = vmatprep.subr.mxu0 0.0
        %1427 = vmatpush1.msra.mxu0 0.0
        %1428 = vmatprep.subr.mxu0 0.0
        %1429 = vmatpush1.msra.mxu0 0.0
        %1430 = vmatprep.subr.mxu0 0.0
        %1431 = vmatpush1.msra.mxu0 0.0
        %1432 = vmatprep.subr.mxu0 0.0
        %1433 = vmatpush1.msra.mxu0 0.0
        %1434 = vmatprep.subr.mxu0 0.0
        %1435 = vmatpush1.msra.mxu0 0.0
        %1436 = vmatprep.subr.mxu0 0.0
        %1437 = vmatpush1.msra.mxu0 0.0
        %1438 = vmatprep.mubr.f32.mxu0 0.0
        %1439 = vmatmul.mubr.f32.gmra.mrb[0].mxu0 %v1327
        %v1440 = vpop.f32.mrb[0].mxu0
        %v1441 = vadd.f32 %v1324, %v1440
        %v1442 = vpop.f32.mrb[0].mxu0
        %1443 = vmatprep.mubr.f32.mxu0 0.0
        %1444 = vmatmul.mubr.f32.gmra.mrb[0].mxu0 %v1330
        %v1445 = vpop.f32.mrb[0].mxu0
        %v1446 = vadd.f32 %v1324, %v1445
        %v1447 = vpop.f32.mrb[0].mxu0
        %1448 = vmatprep.mubr.f32.mxu0 0.0
        %1449 = vmatmul.mubr.f32.gmra.mrb[0].mxu0 %v1333
        %v1450 = vpop.f32.mrb[0].mxu0
        %v1451 = vadd.f32 %v1324, %v1450
        %v1452 = vpop.f32.mrb[0].mxu0
        %1453 = vmatprep.mubr.f32.mxu0 0.0
        %1454 = vmatmul.mubr.f32.gmra.mrb[0].mxu0 %v1336
        %v1455 = vpop.f32.mrb[0].mxu0
        %v1456 = vadd.f32 %v1324, %v1455
        %v1457 = vpop.f32.mrb[0].mxu0
        %1458 = vmatprep.mubr.f32.mxu0 0.0
        %1459 = vmatmul.mubr.f32.gmra.mrb[0].mxu0 %v1339
        %v1460 = vpop.f32.mrb[0].mxu0
        %v1461 = vadd.f32 %v1324, %v1460
        %v1462 = vpop.f32.mrb[0].mxu0
        %1463 = vmatprep.mubr.f32.mxu0 0.0
        %1464 = vmatmul.mubr.f32.gmra.mrb[0].mxu0 %v1342
        %v1465 = vpop.f32.mrb[0].mxu0
        %v1466 = vadd.f32 %v1324, %v1465
        %v1467 = vpop.f32.mrb[0].mxu0
        %1468 = vmatprep.mubr.f32.mxu0 0.0
        %1469 = vmatmul.mubr.f32.gmra.mrb[0].mxu0 %v1345
        %v1470 = vpop.f32.mrb[0].mxu0
        %v1471 = vadd.f32 %v1324, %v1470
        %v1472 = vpop.f32.mrb[0].mxu0
        %1473 = vmatprep.mubr.f32.mxu0 0.0
        %1474 = vmatmul.mubr.f32.gmra.mrb[0].mxu0 %v1348
        %v1475 = vpop.f32.mrb[0].mxu0
        %v1476 = vadd.f32 %v1324, %v1475
        %v1477 = vpop.f32.mrb[0].mxu0
        %1478 = vmatprep.mubr.f32.mxu0 0.0
        %1479 = vmatmul.mubr.f32.gmra.mrb[0].mxu0 %v1351
        %v1480 = vpop.f32.mrb[0].mxu0
        %v1481 = vadd.f32 %v1324, %v1480
        %v1482 = vpop.f32.mrb[0].mxu0
        %1483 = vmatprep.mubr.f32.mxu0 0.0
        %1484 = vmatmul.mubr.f32.gmra.mrb[0].mxu0 %v1354
        %v1485 = vpop.f32.mrb[0].mxu0
        %v1486 = vadd.f32 %v1324, %v1485
        %v1487 = vpop.f32.mrb[0].mxu0
        %1488 = vmatprep.mubr.f32.mxu0 0.0
        %1489 = vmatmul.mubr.f32.gmra.mrb[0].mxu0 %v1357
        %v1490 = vpop.f32.mrb[0].mxu0
        %v1491 = vadd.f32 %v1324, %v1490
        %v1492 = vpop.f32.mrb[0].mxu0
        %1493 = vmatprep.mubr.f32.mxu0 0.0
        %1494 = vmatmul.mubr.f32.gmra.mrb[0].mxu0 %v1360
        %v1495 = vpop.f32.mrb[0].mxu0
        %v1496 = vadd.f32 %v1324, %v1495
        %v1497 = vpop.f32.mrb[0].mxu0
        %1498 = vmatprep.mubr.f32.mxu0 0.0
        %1499 = vmatmul.mubr.f32.gmra.mrb[0].mxu0 %v1363
        %v1500 = vpop.f32.mrb[0].mxu0
        %v1501 = vadd.f32 %v1324, %v1500
        %v1502 = vpop.f32.mrb[0].mxu0
        %1503 = vmatprep.mubr.f32.mxu0 0.0
        %1504 = vmatmul.mubr.f32.gmra.mrb[0].mxu0 %v1366
        %v1505 = vpop.f32.mrb[0].mxu0
        %v1506 = vadd.f32 %v1324, %v1505
        %v1507 = vpop.f32.mrb[0].mxu0
        %1508 = vmatprep.mubr.f32.mxu0 0.0
        %1509 = vmatmul.mubr.f32.gmra.mrb[0].mxu0 %v1369
        %v1510 = vpop.f32.mrb[0].mxu0
        %v1511 = vadd.f32 %v1324, %v1510
        %v1512 = vpop.f32.mrb[0].mxu0
        %1513 = vmatprep.mubr.f32.mxu0 0.0
        %1514 = vmatmul.mubr.f32.gmra.mrb[0].mxu0 %v1372
        %v1515 = vpop.f32.mrb[0].mxu0
        %v1516 = vadd.f32 %v1324, %v1515
        %v1517 = vpop.f32.mrb[0].mxu0
        %1518 = vdwg.mxu0
        %v1519 = vmax.f32 %v1441, %v1446
        %v1520 = vrot.slane %v1519, 4
        %v1521 = vmax.f32 %v1519, %v1520
        %v1522 = vrot.slane %v1521, 2
        %v1523 = vmax.f32 %v1521, %v1522
        %v1524 = vrot.slane %v1523, 1
        %v1525 = vmax.f32 %v1523, %v1524
        %v1526 = vmax.f32 %v1451, %v1456
        %v1527 = vrot.slane %v1526, 4
        %v1528 = vmax.f32 %v1526, %v1527
        %v1529 = vrot.slane %v1528, 2
        %v1530 = vmax.f32 %v1528, %v1529
        %v1531 = vrot.slane %v1530, 1
        %v1532 = vmax.f32 %v1530, %v1531
        %v1533 = vmax.f32 %v1461, %v1466
        %v1534 = vrot.slane %v1533, 4
        %v1535 = vmax.f32 %v1533, %v1534
        %v1536 = vrot.slane %v1535, 2
        %v1537 = vmax.f32 %v1535, %v1536
        %v1538 = vrot.slane %v1537, 1
        %v1539 = vmax.f32 %v1537, %v1538
        %v1540 = vmax.f32 %v1471, %v1476
        %v1541 = vrot.slane %v1540, 4
        %v1542 = vmax.f32 %v1540, %v1541
        %v1543 = vrot.slane %v1542, 2
        %v1544 = vmax.f32 %v1542, %v1543
        %v1545 = vrot.slane %v1544, 1
        %v1546 = vmax.f32 %v1544, %v1545
        %v1547 = vmax.f32 %v1481, %v1486
        %v1548 = vrot.slane %v1547, 4
        %v1549 = vmax.f32 %v1547, %v1548
        %v1550 = vrot.slane %v1549, 2
        %v1551 = vmax.f32 %v1549, %v1550
        %v1552 = vrot.slane %v1551, 1
        %v1553 = vmax.f32 %v1551, %v1552
        %v1554 = vmax.f32 %v1491, %v1496
        %v1555 = vrot.slane %v1554, 4
        %v1556 = vmax.f32 %v1554, %v1555
        %v1557 = vrot.slane %v1556, 2
        %v1558 = vmax.f32 %v1556, %v1557
        %v1559 = vrot.slane %v1558, 1
        %v1560 = vmax.f32 %v1558, %v1559
        %v1561 = vmax.f32 %v1501, %v1506
        %v1562 = vrot.slane %v1561, 4
        %v1563 = vmax.f32 %v1561, %v1562
        %v1564 = vrot.slane %v1563, 2
        %v1565 = vmax.f32 %v1563, %v1564
        %v1566 = vrot.slane %v1565, 1
        %v1567 = vmax.f32 %v1565, %v1566
        %v1568 = vmax.f32 %v1511, %v1516
        %v1569 = vrot.slane %v1568, 4
        %v1570 = vmax.f32 %v1568, %v1569
        %v1571 = vrot.slane %v1570, 2
        %v1572 = vmax.f32 %v1570, %v1571
        %v1573 = vrot.slane %v1572, 1
        %v1574 = vmax.f32 %v1572, %v1573
        %v1583 = vsel %vm1084, %v1532, %v1525
        %v1584 = vsel %vm1086, %v1539, %v1583
        %v1585 = vsel %vm1088, %v1546, %v1584
        %v1586 = vsel %vm1090, %v1553, %v1585
        %v1587 = vsel %vm1092, %v1560, %v1586
        %v1588 = vsel %vm1094, %v1567, %v1587
        %v1589 = vsel %vm1096, %v1574, %v1588
        %1591 = vst [vmem:[%s355] sm:$0xff] %v1589
        %s1592 = sand.u32 %s247, 1
        %s1593 = scalar_lea.sflag [#allocation3], %s1592
        %s1594 = sand.u32 %s247, 1
        %s1595 = smul.addr %s1594, 8
        %s1596 = scalar_lea.vmem [#allocation2], %s1595
        // Predicated region
        $region61: #{tpu_custom_call.1} parent=59 // pred_check
          %p1597 = pneg %p257
        $region62: #{tpu_custom_call.1} parent=59 // pred_check_branch
          %1599 = sbr.rel (%p1597) target = $region64
        $region63: #{tpu_custom_call.1} parent=59 // pred_region
          %s1601 = ssub.s32 128, 128
          %1602 = vsyncadd %s1593, %s1601
          %s1603 = smul.addr %s24, 128
          %s1604 = scalar_lea.hbm %s10, %s1603
          %s1606 = sshll.u32 %s1596, 4
          %s1607 = int_to_ptr.vmem [resolvable:$true] %s1606
          %1609 = dma.vmem_to_hbm [thread:$0]  %s1607, 128, %s1604, %s1593
        $region64: #{tpu_custom_call.1} parent=59 // pred_fallthru
          _
      $region60: #{tpu_custom_call.1} parent=5 // pred_fallthru
        _
      %p1610 = scmp.le.s32.totalorder 2, %s19
      // Predicated region
      $region65: #{tpu_custom_call.1} parent=5 // pred_check
        %p1611 = pneg %p1610
      $region66: #{tpu_custom_call.1} parent=5 // pred_check_branch
        %1613 = sbr.rel (%p1611) target = $region68
      $region67: #{tpu_custom_call.1} parent=5 // pred_region
        %s1614 = ssub.s32 %s19, 2
        // Predicated region
        $region69: #{tpu_custom_call.1} parent=67 // pred_check
          %p1615 = pneg %p263
        $region70: #{tpu_custom_call.1} parent=67 // pred_check_branch
          %1617 = sbr.rel (%p1615) target = $region72
        $region71: #{tpu_custom_call.1} parent=67 // pred_region
          %s1618 = sand.u32 %s248, 1
          %s1619 = scalar_lea.sflag [#allocation3], %s1618
          %s1620 = sand.u32 %s248, 1
          %s1621 = smul.addr %s1620, 8
          %s1622 = scalar_lea.vmem [#allocation2], %s1621
          %1623 = dma.done %s1619, 128
        $region72: #{tpu_custom_call.1} parent=67 // pred_fallthru
          _
      $region68: #{tpu_custom_call.1} parent=5 // pred_fallthru
        _
    $region6: #{tpu_custom_call.1} parent=1 // loop_footer
      %s23 = sadd.s32 1, %s19
    $region7: #{tpu_custom_call.1} parent=1 // loop_footer_branch
      %18 = sbr.rel target = $region3
    $region8: #{tpu_custom_call.1} parent=1 // loop_exit
      _
    %1624 = vsyncpa [#allocation3], 1
    %s1625 = scalar_lea.sflag [#allocation3], 1
    %1626 = vsyncpa %s1625, 1

</llo_original>
